<compile_context>
chip_gen: v7x
topology: tpu7x:2x2x1
jax: 0.10.0
libtpu: 0.0.40
codegen_flags: <defaults>
</compile_context>

<pallas_src>
import math

import numpy as np
from numpy import polynomial

import jax
import jax.numpy as jnp
from jax.experimental import pallas as pl
from jax.experimental.pallas import tpu as pltpu


# ---------------------------------------------------------------------------
# Bernstein polynomial coefficients (same as BernConv.get_bern_coeff)
# ---------------------------------------------------------------------------
def get_bern_coeff(degree):
    def Bernstein(de, i):
        coefficients = [0] * i + [math.comb(de, i)]
        first_term = polynomial.polynomial.Polynomial(coefficients)
        second_term = polynomial.polynomial.Polynomial([1, -1]) ** (de - i)
        return first_term * second_term

    return [Bernstein(degree, i).coef for i in range(degree + 1)]


# ---------------------------------------------------------------------------
# Glue: dense sym-normalized Laplacian, matching PyG get_laplacian('sym') and
# the MessagePassing aggregation convention (out[i] = sum_e w_e * x[src_e]
# over edges with dst==i, plus identity self-loops).
#
# NOTE: degree is computed from source endpoints only; this is correct because
# the edge list is required to contain both directions of every edge
# (symmetric edge list), as constructed in __main__.
# ---------------------------------------------------------------------------
def build_sym_laplacian(edge_index, num_nodes):
    row = edge_index[:, 0]          # source
    col = edge_index[:, 1]          # target
    w = jnp.ones((edge_index.shape[0],), jnp.float32)
    deg = jnp.zeros((num_nodes,), jnp.float32).at[row].add(w)
    deg_inv_sqrt = jnp.where(deg > 0, jax.lax.rsqrt(jnp.maximum(deg, 1e-30)), 0.0)
    lap_w = -deg_inv_sqrt[row] * w * deg_inv_sqrt[col]
    L = jnp.zeros((num_nodes, num_nodes), jnp.float32).at[col, row].add(lap_w)
    L = L + jnp.eye(num_nodes, dtype=jnp.float32)
    return L


# ---------------------------------------------------------------------------
# Pallas kernel: computes the single parameter-free BernConv slab
#   out[:, k*h:(k+1)*h] = sum_i coeffs[k][i] * (L^i x)
# The L^i x chain runs on the MXU; Bernstein accumulation goes straight into
# the resident output ref (output block is the whole array, so it stays in
# VMEM for the whole call). Zero Bernstein coefficients (i < k) are skipped.
# ---------------------------------------------------------------------------
def make_amnet_kernel(K, h, coeffs):
    def kernel(L_ref, x_ref, o_ref):
        L = L_ref[...]                                  # (n, n) f32
        cur = x_ref[...].astype(jnp.float32)            # Bx_0 = x

        # i = 0 contribution: initializes every Bernstein column slab.
        for k in range(K + 1):
            c_k0 = float(coeffs[k][0])
            o_ref[:, k * h:(k + 1) * h] = (cur * c_k0).astype(o_ref.dtype)

        # i = 1..K: serial MXU chain Bx_i = L @ Bx_{i-1}; accumulate on VPU.
        for i in range(1, K + 1):
            cur = jnp.dot(L, cur, preferred_element_type=jnp.float32)
            for k in range(K + 1):
                c_ki = float(coeffs[k][i])
                if c_ki != 0.0:                          # exact zeros for i < k
                    o_ref[:, k * h:(k + 1) * h] += (cur * c_ki).astype(o_ref.dtype)

    return kernel


def amnet_ms_forward(x, L, K, filter_num):
    n, h = x.shape
    out_dim = (K + 1) * h
    coeffs = get_bern_coeff(K)
    kernel = make_amnet_kernel(K, h, coeffs)

    slab = pl.pallas_call(
        kernel,
        out_shape=jax.ShapeDtypeStruct((n, out_dim), jnp.float32),
        grid=(1,),
        in_specs=[
            pl.BlockSpec((n, n), lambda i: (0, 0)),      # L, whole array
            pl.BlockSpec((n, h), lambda i: (0, 0)),      # x, whole array
        ],
        out_specs=pl.BlockSpec((n, out_dim), lambda i: (0, 0)),
        compiler_params=pltpu.CompilerParams(
            dimension_semantics=("arbitrary",)),
    )(L, x.astype(jnp.float32))

    # The filter_num identical, parameter-free filters: free broadcast in JAX,
    # already in the PyTorch ordering [N, filter_num, (K+1)*H].
    return jnp.broadcast_to(slab[:, None, :], (n, filter_num, out_dim)).astype(x.dtype)


# ---------------------------------------------------------------------------
# Pure-JAX reference (mirrors the PyTorch module exactly).
# ---------------------------------------------------------------------------
def amnet_ms_reference(x, L, K, filter_num):
    coeffs = get_bern_coeff(K)
    Bx = [x]
    cur = x
    for _ in range(K):
        cur = L @ cur
        Bx.append(cur)
    cols = []
    for k in range(K + 1):
        basis = Bx[0] * float(coeffs[k][0])
        for i in range(1, K + 1):
            basis = basis + Bx[i] * float(coeffs[k][i])
        cols.append(basis)
    single = jnp.concatenate(cols, axis=1)               # [N, (K+1)*H]
    return jnp.broadcast_to(single[:, None, :],
                            (x.shape[0], filter_num, single.shape[1]))


if __name__ == "__main__":
    # Small shapes consistent with the module's forward:
    #   x: [n, h] node features, edge_index: [e, 2], K filters of degree K.
    n, h, K, filter_num = 64, 32, 4, 5

    key = jax.random.PRNGKey(0)
    kx, ks, kd = jax.random.split(key, 3)

    x = jax.random.normal(kx, (n, h), jnp.float32)

    # Deterministic undirected edge list (both directions), no self loops.
    e_half = 128
    src = jax.random.randint(ks, (e_half,), 0, n)
    dst = jax.random.randint(kd, (e_half,), 0, n)
    dst = jnp.where(src == dst, (dst + 1) % n, dst)
    edge_index = jnp.concatenate(
        [jnp.stack([src, dst], axis=1), jnp.stack([dst, src], axis=1)], axis=0
    ).astype(jnp.int32)                                   # [e, 2], symmetric

    # BernConv takes conv_weight but never uses it (reset_parameters is a
    # no-op and the filters are parameter-free), so there are no weights to
    # initialize beyond the Bernstein coefficients computed above.
    L = build_sym_laplacian(edge_index, n)

    out = amnet_ms_forward(x, L, K, filter_num)
    out = jax.block_until_ready(out)

    ref = amnet_ms_reference(x, L, K, filter_num)
    assert out.shape == (n, filter_num, (K + 1) * h), out.shape
    np.testing.assert_allclose(np.asarray(out), np.asarray(ref),
                               rtol=1e-4, atol=1e-4)

    print("KERNEL_OK")
</pallas_src>

<mosaic_0001>
module attributes {stable_mosaic.version = 11 : i64} {
  func.func @kernel(%arg0: i32, %arg1: memref<64x64xf32, #tpu.memory_space<vmem>>, %arg2: memref<64x32xf32, #tpu.memory_space<vmem>>, %arg3: memref<64x160xf32, #tpu.memory_space<vmem>>) attributes {dimension_semantics = [#tpu.dimension_semantics<arbitrary>], iteration_bounds = array<i64: 1>, scalar_prefetch = 0 : i64, scratch_operands = 0 : i64, tpu.core_type = #tpu.core_type<tc>, window_params = [{pipeline_mode = #tpu.pipeline_mode<synchronous>, transform_indices = @transform_0, window_bounds = array<i64: 64, 64>}, {pipeline_mode = #tpu.pipeline_mode<synchronous>, transform_indices = @transform_1, window_bounds = array<i64: 64, 32>}, {pipeline_mode = #tpu.pipeline_mode<synchronous>, transform_indices = @transform_2, window_bounds = array<i64: 64, 160>}]} {
    %c0 = arith.constant 0 : index
    %c0_0 = arith.constant 0 : index
    %0 = vector.load %arg1[%c0, %c0_0] : memref<64x64xf32, #tpu.memory_space<vmem>>, vector<64x64xf32>
    %c0_1 = arith.constant 0 : index
    %c0_2 = arith.constant 0 : index
    %1 = vector.load %arg2[%c0_1, %c0_2] : memref<64x32xf32, #tpu.memory_space<vmem>>, vector<64x32xf32>
    %cst = arith.constant 1.000000e+00 : f32
    %2 = vector.broadcast %cst : f32 to vector<64x32xf32>
    %3 = arith.mulf %1, %2 : vector<64x32xf32>
    %c0_3 = arith.constant 0 : index
    %c0_4 = arith.constant 0 : index
    %4 = vector.load %arg3[%c0_3, %c0_4] : memref<64x160xf32, #tpu.memory_space<vmem>>, vector<64x32xf32>
    tpu.vector_store %arg3[%c0_3, %c0_4], %3 {strides = array<i32>} : memref<64x160xf32, #tpu.memory_space<vmem>>, vector<64x32xf32>,
    %cst_5 = arith.constant 0.000000e+00 : f32
    %5 = vector.broadcast %cst_5 : f32 to vector<64x32xf32>
    %6 = arith.mulf %1, %5 : vector<64x32xf32>
    %c0_6 = arith.constant 0 : index
    %c32 = arith.constant 32 : index
    %7 = vector.load %arg3[%c0_6, %c32] : memref<64x160xf32, #tpu.memory_space<vmem>>, vector<64x32xf32>
    tpu.vector_store %arg3[%c0_6, %c32], %6 {strides = array<i32>} : memref<64x160xf32, #tpu.memory_space<vmem>>, vector<64x32xf32>,
    %cst_7 = arith.constant 0.000000e+00 : f32
    %8 = vector.broadcast %cst_7 : f32 to vector<64x32xf32>
    %9 = arith.mulf %1, %8 : vector<64x32xf32>
    %c0_8 = arith.constant 0 : index
    %c64 = arith.constant 64 : index
    %10 = vector.load %arg3[%c0_8, %c64] : memref<64x160xf32, #tpu.memory_space<vmem>>, vector<64x32xf32>
    tpu.vector_store %arg3[%c0_8, %c64], %9 {strides = array<i32>} : memref<64x160xf32, #tpu.memory_space<vmem>>, vector<64x32xf32>,
    %cst_9 = arith.constant 0.000000e+00 : f32
    %11 = vector.broadcast %cst_9 : f32 to vector<64x32xf32>
    %12 = arith.mulf %1, %11 : vector<64x32xf32>
    %c0_10 = arith.constant 0 : index
    %c96 = arith.constant 96 : index
    %13 = vector.load %arg3[%c0_10, %c96] : memref<64x160xf32, #tpu.memory_space<vmem>>, vector<64x32xf32>
    tpu.vector_store %arg3[%c0_10, %c96], %12 {strides = array<i32>} : memref<64x160xf32, #tpu.memory_space<vmem>>, vector<64x32xf32>,
    %cst_11 = arith.constant 0.000000e+00 : f32
    %14 = vector.broadcast %cst_11 : f32 to vector<64x32xf32>
    %15 = arith.mulf %1, %14 : vector<64x32xf32>
    %c0_12 = arith.constant 0 : index
    %c128 = arith.constant 128 : index
    %16 = vector.load %arg3[%c0_12, %c128] : memref<64x160xf32, #tpu.memory_space<vmem>>, vector<64x32xf32>
    tpu.vector_store %arg3[%c0_12, %c128], %15 {strides = array<i32>} : memref<64x160xf32, #tpu.memory_space<vmem>>, vector<64x32xf32>,
    %cst_13 = arith.constant dense<0.000000e+00> : vector<64x32xf32>
    %17 = tpu.matmul %0, %1, %cst_13 {dimension_numbers = #tpu.dot_dimension_numbers<[1], [0], [0], [1], [0, 0, 1, 1], [], []>} : vector<64x64xf32>, vector<64x32xf32>, vector<64x32xf32> -> vector<64x32xf32>
    %c0_14 = arith.constant 0 : index
    %c0_15 = arith.constant 0 : index
    %18 = vector.load %arg3[%c0_14, %c0_15] : memref<64x160xf32, #tpu.memory_space<vmem>>, vector<64x32xf32>
    %cst_16 = arith.constant -4.000000e+00 : f32
    %19 = vector.broadcast %cst_16 : f32 to vector<64x32xf32>
    %20 = arith.mulf %17, %19 : vector<64x32xf32>
    %21 = arith.addf %18, %20 : vector<64x32xf32>
    %c0_17 = arith.constant 0 : index
    %c0_18 = arith.constant 0 : index
    %22 = vector.load %arg3[%c0_17, %c0_18] : memref<64x160xf32, #tpu.memory_space<vmem>>, vector<64x32xf32>
    tpu.vector_store %arg3[%c0_17, %c0_18], %21 {strides = array<i32>} : memref<64x160xf32, #tpu.memory_space<vmem>>, vector<64x32xf32>,
    %c0_19 = arith.constant 0 : index
    %c32_20 = arith.constant 32 : index
    %23 = vector.load %arg3[%c0_19, %c32_20] : memref<64x160xf32, #tpu.memory_space<vmem>>, vector<64x32xf32>
    %cst_21 = arith.constant 4.000000e+00 : f32
    %24 = vector.broadcast %cst_21 : f32 to vector<64x32xf32>
    %25 = arith.mulf %17, %24 : vector<64x32xf32>
    %26 = arith.addf %23, %25 : vector<64x32xf32>
    %c0_22 = arith.constant 0 : index
    %c32_23 = arith.constant 32 : index
    %27 = vector.load %arg3[%c0_22, %c32_23] : memref<64x160xf32, #tpu.memory_space<vmem>>, vector<64x32xf32>
    tpu.vector_store %arg3[%c0_22, %c32_23], %26 {strides = array<i32>} : memref<64x160xf32, #tpu.memory_space<vmem>>, vector<64x32xf32>,
    %cst_24 = arith.constant dense<0.000000e+00> : vector<64x32xf32>
    %28 = tpu.matmul %0, %17, %cst_24 {dimension_numbers = #tpu.dot_dimension_numbers<[1], [0], [0], [1], [0, 0, 1, 1], [], []>} : vector<64x64xf32>, vector<64x32xf32>, vector<64x32xf32> -> vector<64x32xf32>
    %c0_25 = arith.constant 0 : index
    %c0_26 = arith.constant 0 : index
    %29 = vector.load %arg3[%c0_25, %c0_26] : memref<64x160xf32, #tpu.memory_space<vmem>>, vector<64x32xf32>
    %cst_27 = arith.constant 6.000000e+00 : f32
    %30 = vector.broadcast %cst_27 : f32 to vector<64x32xf32>
    %31 = arith.mulf %28, %30 : vector<64x32xf32>
    %32 = arith.addf %29, %31 : vector<64x32xf32>
    %c0_28 = arith.constant 0 : index
    %c0_29 = arith.constant 0 : index
    %33 = vector.load %arg3[%c0_28, %c0_29] : memref<64x160xf32, #tpu.memory_space<vmem>>, vector<64x32xf32>
    tpu.vector_store %arg3[%c0_28, %c0_29], %32 {strides = array<i32>} : memref<64x160xf32, #tpu.memory_space<vmem>>, vector<64x32xf32>,
    %c0_30 = arith.constant 0 : index
    %c32_31 = arith.constant 32 : index
    %34 = vector.load %arg3[%c0_30, %c32_31] : memref<64x160xf32, #tpu.memory_space<vmem>>, vector<64x32xf32>
    %cst_32 = arith.constant -1.200000e+01 : f32
    %35 = vector.broadcast %cst_32 : f32 to vector<64x32xf32>
    %36 = arith.mulf %28, %35 : vector<64x32xf32>
    %37 = arith.addf %34, %36 : vector<64x32xf32>
    %c0_33 = arith.constant 0 : index
    %c32_34 = arith.constant 32 : index
    %38 = vector.load %arg3[%c0_33, %c32_34] : memref<64x160xf32, #tpu.memory_space<vmem>>, vector<64x32xf32>
    tpu.vector_store %arg3[%c0_33, %c32_34], %37 {strides = array<i32>} : memref<64x160xf32, #tpu.memory_space<vmem>>, vector<64x32xf32>,
    %c0_35 = arith.constant 0 : index
    %c64_36 = arith.constant 64 : index
    %39 = vector.load %arg3[%c0_35, %c64_36] : memref<64x160xf32, #tpu.memory_space<vmem>>, vector<64x32xf32>
    %cst_37 = arith.constant 6.000000e+00 : f32
    %40 = vector.broadcast %cst_37 : f32 to vector<64x32xf32>
    %41 = arith.mulf %28, %40 : vector<64x32xf32>
    %42 = arith.addf %39, %41 : vector<64x32xf32>
    %c0_38 = arith.constant 0 : index
    %c64_39 = arith.constant 64 : index
    %43 = vector.load %arg3[%c0_38, %c64_39] : memref<64x160xf32, #tpu.memory_space<vmem>>, vector<64x32xf32>
    tpu.vector_store %arg3[%c0_38, %c64_39], %42 {strides = array<i32>} : memref<64x160xf32, #tpu.memory_space<vmem>>, vector<64x32xf32>,
    %cst_40 = arith.constant dense<0.000000e+00> : vector<64x32xf32>
    %44 = tpu.matmul %0, %28, %cst_40 {dimension_numbers = #tpu.dot_dimension_numbers<[1], [0], [0], [1], [0, 0, 1, 1], [], []>} : vector<64x64xf32>, vector<64x32xf32>, vector<64x32xf32> -> vector<64x32xf32>
    %c0_41 = arith.constant 0 : index
    %c0_42 = arith.constant 0 : index
    %45 = vector.load %arg3[%c0_41, %c0_42] : memref<64x160xf32, #tpu.memory_space<vmem>>, vector<64x32xf32>
    %cst_43 = arith.constant -4.000000e+00 : f32
    %46 = vector.broadcast %cst_43 : f32 to vector<64x32xf32>
    %47 = arith.mulf %44, %46 : vector<64x32xf32>
    %48 = arith.addf %45, %47 : vector<64x32xf32>
    %c0_44 = arith.constant 0 : index
    %c0_45 = arith.constant 0 : index
    %49 = vector.load %arg3[%c0_44, %c0_45] : memref<64x160xf32, #tpu.memory_space<vmem>>, vector<64x32xf32>
    tpu.vector_store %arg3[%c0_44, %c0_45], %48 {strides = array<i32>} : memref<64x160xf32, #tpu.memory_space<vmem>>, vector<64x32xf32>,
    %c0_46 = arith.constant 0 : index
    %c32_47 = arith.constant 32 : index
    %50 = vector.load %arg3[%c0_46, %c32_47] : memref<64x160xf32, #tpu.memory_space<vmem>>, vector<64x32xf32>
    %cst_48 = arith.constant 1.200000e+01 : f32
    %51 = vector.broadcast %cst_48 : f32 to vector<64x32xf32>
    %52 = arith.mulf %44, %51 : vector<64x32xf32>
    %53 = arith.addf %50, %52 : vector<64x32xf32>
    %c0_49 = arith.constant 0 : index
    %c32_50 = arith.constant 32 : index
    %54 = vector.load %arg3[%c0_49, %c32_50] : memref<64x160xf32, #tpu.memory_space<vmem>>, vector<64x32xf32>
    tpu.vector_store %arg3[%c0_49, %c32_50], %53 {strides = array<i32>} : memref<64x160xf32, #tpu.memory_space<vmem>>, vector<64x32xf32>,
    %c0_51 = arith.constant 0 : index
    %c64_52 = arith.constant 64 : index
    %55 = vector.load %arg3[%c0_51, %c64_52] : memref<64x160xf32, #tpu.memory_space<vmem>>, vector<64x32xf32>
    %cst_53 = arith.constant -1.200000e+01 : f32
    %56 = vector.broadcast %cst_53 : f32 to vector<64x32xf32>
    %57 = arith.mulf %44, %56 : vector<64x32xf32>
    %58 = arith.addf %55, %57 : vector<64x32xf32>
    %c0_54 = arith.constant 0 : index
    %c64_55 = arith.constant 64 : index
    %59 = vector.load %arg3[%c0_54, %c64_55] : memref<64x160xf32, #tpu.memory_space<vmem>>, vector<64x32xf32>
    tpu.vector_store %arg3[%c0_54, %c64_55], %58 {strides = array<i32>} : memref<64x160xf32, #tpu.memory_space<vmem>>, vector<64x32xf32>,
    %c0_56 = arith.constant 0 : index
    %c96_57 = arith.constant 96 : index
    %60 = vector.load %arg3[%c0_56, %c96_57] : memref<64x160xf32, #tpu.memory_space<vmem>>, vector<64x32xf32>
    %cst_58 = arith.constant 4.000000e+00 : f32
    %61 = vector.broadcast %cst_58 : f32 to vector<64x32xf32>
    %62 = arith.mulf %44, %61 : vector<64x32xf32>
    %63 = arith.addf %60, %62 : vector<64x32xf32>
    %c0_59 = arith.constant 0 : index
    %c96_60 = arith.constant 96 : index
    %64 = vector.load %arg3[%c0_59, %c96_60] : memref<64x160xf32, #tpu.memory_space<vmem>>, vector<64x32xf32>
    tpu.vector_store %arg3[%c0_59, %c96_60], %63 {strides = array<i32>} : memref<64x160xf32, #tpu.memory_space<vmem>>, vector<64x32xf32>,
    %cst_61 = arith.constant dense<0.000000e+00> : vector<64x32xf32>
    %65 = tpu.matmul %0, %44, %cst_61 {dimension_numbers = #tpu.dot_dimension_numbers<[1], [0], [0], [1], [0, 0, 1, 1], [], []>} : vector<64x64xf32>, vector<64x32xf32>, vector<64x32xf32> -> vector<64x32xf32>
    %c0_62 = arith.constant 0 : index
    %c0_63 = arith.constant 0 : index
    %66 = vector.load %arg3[%c0_62, %c0_63] : memref<64x160xf32, #tpu.memory_space<vmem>>, vector<64x32xf32>
    %cst_64 = arith.constant 1.000000e+00 : f32
    %67 = vector.broadcast %cst_64 : f32 to vector<64x32xf32>
    %68 = arith.mulf %65, %67 : vector<64x32xf32>
    %69 = arith.addf %66, %68 : vector<64x32xf32>
    %c0_65 = arith.constant 0 : index
    %c0_66 = arith.constant 0 : index
    %70 = vector.load %arg3[%c0_65, %c0_66] : memref<64x160xf32, #tpu.memory_space<vmem>>, vector<64x32xf32>
    tpu.vector_store %arg3[%c0_65, %c0_66], %69 {strides = array<i32>} : memref<64x160xf32, #tpu.memory_space<vmem>>, vector<64x32xf32>,
    %c0_67 = arith.constant 0 : index
    %c32_68 = arith.constant 32 : index
    %71 = vector.load %arg3[%c0_67, %c32_68] : memref<64x160xf32, #tpu.memory_space<vmem>>, vector<64x32xf32>
    %cst_69 = arith.constant -4.000000e+00 : f32
    %72 = vector.broadcast %cst_69 : f32 to vector<64x32xf32>
    %73 = arith.mulf %65, %72 : vector<64x32xf32>
    %74 = arith.addf %71, %73 : vector<64x32xf32>
    %c0_70 = arith.constant 0 : index
    %c32_71 = arith.constant 32 : index
    %75 = vector.load %arg3[%c0_70, %c32_71] : memref<64x160xf32, #tpu.memory_space<vmem>>, vector<64x32xf32>
    tpu.vector_store %arg3[%c0_70, %c32_71], %74 {strides = array<i32>} : memref<64x160xf32, #tpu.memory_space<vmem>>, vector<64x32xf32>,
    %c0_72 = arith.constant 0 : index
    %c64_73 = arith.constant 64 : index
    %76 = vector.load %arg3[%c0_72, %c64_73] : memref<64x160xf32, #tpu.memory_space<vmem>>, vector<64x32xf32>
    %cst_74 = arith.constant 6.000000e+00 : f32
    %77 = vector.broadcast %cst_74 : f32 to vector<64x32xf32>
    %78 = arith.mulf %65, %77 : vector<64x32xf32>
    %79 = arith.addf %76, %78 : vector<64x32xf32>
    %c0_75 = arith.constant 0 : index
    %c64_76 = arith.constant 64 : index
    %80 = vector.load %arg3[%c0_75, %c64_76] : memref<64x160xf32, #tpu.memory_space<vmem>>, vector<64x32xf32>
    tpu.vector_store %arg3[%c0_75, %c64_76], %79 {strides = array<i32>} : memref<64x160xf32, #tpu.memory_space<vmem>>, vector<64x32xf32>,
    %c0_77 = arith.constant 0 : index
    %c96_78 = arith.constant 96 : index
    %81 = vector.load %arg3[%c0_77, %c96_78] : memref<64x160xf32, #tpu.memory_space<vmem>>, vector<64x32xf32>
    %cst_79 = arith.constant -4.000000e+00 : f32
    %82 = vector.broadcast %cst_79 : f32 to vector<64x32xf32>
    %83 = arith.mulf %65, %82 : vector<64x32xf32>
    %84 = arith.addf %81, %83 : vector<64x32xf32>
    %c0_80 = arith.constant 0 : index
    %c96_81 = arith.constant 96 : index
    %85 = vector.load %arg3[%c0_80, %c96_81] : memref<64x160xf32, #tpu.memory_space<vmem>>, vector<64x32xf32>
    tpu.vector_store %arg3[%c0_80, %c96_81], %84 {strides = array<i32>} : memref<64x160xf32, #tpu.memory_space<vmem>>, vector<64x32xf32>,
    %c0_82 = arith.constant 0 : index
    %c128_83 = arith.constant 128 : index
    %86 = vector.load %arg3[%c0_82, %c128_83] : memref<64x160xf32, #tpu.memory_space<vmem>>, vector<64x32xf32>
    %cst_84 = arith.constant 1.000000e+00 : f32
    %87 = vector.broadcast %cst_84 : f32 to vector<64x32xf32>
    %88 = arith.mulf %65, %87 : vector<64x32xf32>
    %89 = arith.addf %86, %88 : vector<64x32xf32>
    %c0_85 = arith.constant 0 : index
    %c128_86 = arith.constant 128 : index
    %90 = vector.load %arg3[%c0_85, %c128_86] : memref<64x160xf32, #tpu.memory_space<vmem>>, vector<64x32xf32>
    tpu.vector_store %arg3[%c0_85, %c128_86], %89 {strides = array<i32>} : memref<64x160xf32, #tpu.memory_space<vmem>>, vector<64x32xf32>,
    return
  }
  func.func @transform_0(%arg0: i32) -> (i32, i32) {
    %c0_i32 = arith.constant 0 : i32
    %c0_i32_0 = arith.constant 0 : i32
    %c0_i32_1 = arith.constant 0 : i32
    return %c0_i32, %c0_i32_0 : i32, i32
  }
  func.func @transform_1(%arg0: i32) -> (i32, i32) {
    %c0_i32 = arith.constant 0 : i32
    %c0_i32_0 = arith.constant 0 : i32
    %c0_i32_1 = arith.constant 0 : i32
    return %c0_i32, %c0_i32_0 : i32, i32
  }
  func.func @transform_2(%arg0: i32) -> (i32, i32) {
    %c0_i32 = arith.constant 0 : i32
    %c0_i32_0 = arith.constant 0 : i32
    %c0_i32_1 = arith.constant 0 : i32
    return %c0_i32, %c0_i32_0 : i32, i32
  }
}

</mosaic_0001>

<llo_original>
// kernel: tpu_custom_call.1
$region0: #{tpu_custom_call.1}
  #allocation0 [shape = 'u32[]', space=smem, size = 0x4, offset = 0x4, fixed_abs, tag = 'smem constant byte address 0x4 - core index']
  #allocation1 [shape = 'u32[144,128]{1,0:T(1,128)}', space=vmem, size = 0x12000, scoped, tag = 'internal scratch']
  %s0 = inlined_call_operand.vmem [shape: f32[64,64], index: 0, kind: input, shape index: {}]
  %s1 = inlined_call_operand.vmem [shape: f32[64,32], index: 1, kind: input, shape index: {}]
  %s2 = inlined_call_operand.hbm [shape: f32[64,160], index: 2, kind: output, shape index: {}]
  %s3 = sld [smem:[#allocation0]]
  $region18: #{tpu_custom_call.1} parent=0
    _
  %s5 = ssub.s32 1, %s3
  %s6 = scalar_select 0, %s5, %s3
  $region1: #{tpu_custom_call.1} parent=0
    #allocation2 [shape = 'u8[65536]{0}', space=vmem, size = 0x10000, scoped, tag = 'output window, operand 0, single buffered']
    #allocation3 [shape = 's32[1]{0}', space=sflag, size = 0x4, scoped, tag = 'scoped memory for tpu_custom_call.1']
    %7 = vsyncpa [#allocation3], 0
    // Predicated region
    $region2: #{tpu_custom_call.1} parent=1 // pred_check
      _
    $region3: #{tpu_custom_call.1} parent=1 // pred_check_branch
      %9 = sbr.rel (0) target = $region5
    $region4: #{tpu_custom_call.1} parent=1 // pred_region
      _
    $region5: #{tpu_custom_call.1} parent=1 // pred_fallthru
      _
    // Predicated region
    $region6: #{tpu_custom_call.1} parent=1 // pred_check
      _
    $region7: #{tpu_custom_call.1} parent=1 // pred_check_branch
      %11 = sbr.rel (0) target = $region9
    $region8: #{tpu_custom_call.1} parent=1 // pred_region
      _
    $region9: #{tpu_custom_call.1} parent=1 // pred_fallthru
      _
    %v12 = vld [vmem:[%s0] sm:$0xff]
    %v13 = vld [vmem:[%s0 + $0x8] sm:$0xff]
    %v14 = vld [vmem:[%s0 + $0x10] sm:$0xff]
    %v15 = vld [vmem:[%s0 + $0x18] sm:$0xff]
    %v16 = vld [vmem:[%s0 + $0x20] sm:$0xff]
    %v17 = vld [vmem:[%s0 + $0x28] sm:$0xff]
    %v18 = vld [vmem:[%s0 + $0x30] sm:$0xff]
    %v19 = vld [vmem:[%s0 + $0x38] sm:$0xff]
    %v20 = vld [vmem:[%s1] sm:$0xff]
    %v21 = vld [vmem:[%s1 + $0x8] sm:$0xff]
    %v22 = vld [vmem:[%s1 + $0x10] sm:$0xff]
    %v23 = vld [vmem:[%s1 + $0x18] sm:$0xff]
    %v24 = vld [vmem:[%s1 + $0x20] sm:$0xff]
    %v25 = vld [vmem:[%s1 + $0x28] sm:$0xff]
    %v26 = vld [vmem:[%s1 + $0x30] sm:$0xff]
    %v27 = vld [vmem:[%s1 + $0x38] sm:$0xff]
    %vm28 = vcmask 261120
    %29 = vst.msk [vmem:[#allocation2] sm:$0xff] %vm28, %v20
    %30 = vst.msk [vmem:[#allocation2 + $0x10] sm:$0xff] %vm28, %v21
    %31 = vst.msk [vmem:[#allocation2 + $0x20] sm:$0xff] %vm28, %v22
    %32 = vst.msk [vmem:[#allocation2 + $0x30] sm:$0xff] %vm28, %v23
    %33 = vst.msk [vmem:[#allocation2 + $0x40] sm:$0xff] %vm28, %v24
    %34 = vst.msk [vmem:[#allocation2 + $0x50] sm:$0xff] %vm28, %v25
    %35 = vst.msk [vmem:[#allocation2 + $0x60] sm:$0xff] %vm28, %v26
    %36 = vst.msk [vmem:[#allocation2 + $0x70] sm:$0xff] %vm28, %v27
    %v37 = vmul.f32 %v20, 0.0
    %v38 = vmul.f32 %v21, 0.0
    %v39 = vmul.f32 %v22, 0.0
    %v40 = vmul.f32 %v23, 0.0
    %v41 = vmul.f32 %v24, 0.0
    %v42 = vmul.f32 %v25, 0.0
    %v43 = vmul.f32 %v26, 0.0
    %v44 = vmul.f32 %v27, 0.0
    %53 = vrot.lane.b32.xlu0 %v37, 32
    %v54 = vpop.permute.xlu0 %53
    %55 = vrot.lane.b32.xlu0 %v38, 32
    %v56 = vpop.permute.xlu0 %55
    %57 = vrot.lane.b32.xlu0 %v39, 32
    %v58 = vpop.permute.xlu0 %57
    %59 = vrot.lane.b32.xlu0 %v40, 32
    %v60 = vpop.permute.xlu0 %59
    %61 = vrot.lane.b32.xlu0 %v41, 32
    %v62 = vpop.permute.xlu0 %61
    %63 = vrot.lane.b32.xlu0 %v42, 32
    %v64 = vpop.permute.xlu0 %63
    %65 = vrot.lane.b32.xlu0 %v43, 32
    %v66 = vpop.permute.xlu0 %65
    %67 = vrot.lane.b32.xlu0 %v44, 32
    %v68 = vpop.permute.xlu0 %67
    %vm77 = vcmask 523520
    %78 = vst.msk [vmem:[#allocation2] sm:$0xff] %vm77, %v54
    %79 = vst.msk [vmem:[#allocation2 + $0x10] sm:$0xff] %vm77, %v56
    %80 = vst.msk [vmem:[#allocation2 + $0x20] sm:$0xff] %vm77, %v58
    %81 = vst.msk [vmem:[#allocation2 + $0x30] sm:$0xff] %vm77, %v60
    %82 = vst.msk [vmem:[#allocation2 + $0x40] sm:$0xff] %vm77, %v62
    %83 = vst.msk [vmem:[#allocation2 + $0x50] sm:$0xff] %vm77, %v64
    %84 = vst.msk [vmem:[#allocation2 + $0x60] sm:$0xff] %vm77, %v66
    %85 = vst.msk [vmem:[#allocation2 + $0x70] sm:$0xff] %vm77, %v68
    %86 = vrot.lane.b32.xlu0 %v37, 64
    %v87 = vpop.permute.xlu0 %86
    %88 = vrot.lane.b32.xlu0 %v38, 64
    %v89 = vpop.permute.xlu0 %88
    %90 = vrot.lane.b32.xlu0 %v39, 64
    %v91 = vpop.permute.xlu0 %90
    %92 = vrot.lane.b32.xlu0 %v40, 64
    %v93 = vpop.permute.xlu0 %92
    %94 = vrot.lane.b32.xlu0 %v41, 64
    %v95 = vpop.permute.xlu0 %94
    %96 = vrot.lane.b32.xlu0 %v42, 64
    %v97 = vpop.permute.xlu0 %96
    %98 = vrot.lane.b32.xlu0 %v43, 64
    %v99 = vpop.permute.xlu0 %98
    %100 = vrot.lane.b32.xlu0 %v44, 64
    %v101 = vpop.permute.xlu0 %100
    %vm110 = vcmask 785920
    %111 = vst.msk [vmem:[#allocation2] sm:$0xff] %vm110, %v87
    %112 = vst.msk [vmem:[#allocation2 + $0x10] sm:$0xff] %vm110, %v89
    %113 = vst.msk [vmem:[#allocation2 + $0x20] sm:$0xff] %vm110, %v91
    %114 = vst.msk [vmem:[#allocation2 + $0x30] sm:$0xff] %vm110, %v93
    %115 = vst.msk [vmem:[#allocation2 + $0x40] sm:$0xff] %vm110, %v95
    %116 = vst.msk [vmem:[#allocation2 + $0x50] sm:$0xff] %vm110, %v97
    %117 = vst.msk [vmem:[#allocation2 + $0x60] sm:$0xff] %vm110, %v99
    %118 = vst.msk [vmem:[#allocation2 + $0x70] sm:$0xff] %vm110, %v101
    %119 = vrot.lane.b32.xlu0 %v37, 96
    %v120 = vpop.permute.xlu0 %119
    %121 = vrot.lane.b32.xlu0 %v38, 96
    %v122 = vpop.permute.xlu0 %121
    %123 = vrot.lane.b32.xlu0 %v39, 96
    %v124 = vpop.permute.xlu0 %123
    %125 = vrot.lane.b32.xlu0 %v40, 96
    %v126 = vpop.permute.xlu0 %125
    %127 = vrot.lane.b32.xlu0 %v41, 96
    %v128 = vpop.permute.xlu0 %127
    %129 = vrot.lane.b32.xlu0 %v42, 96
    %v130 = vpop.permute.xlu0 %129
    %131 = vrot.lane.b32.xlu0 %v43, 96
    %v132 = vpop.permute.xlu0 %131
    %133 = vrot.lane.b32.xlu0 %v44, 96
    %v134 = vpop.permute.xlu0 %133
    %vm143 = vcmask 1048320
    %144 = vst.msk [vmem:[#allocation2] sm:$0xff] %vm143, %v120
    %145 = vst.msk [vmem:[#allocation2 + $0x10] sm:$0xff] %vm143, %v122
    %146 = vst.msk [vmem:[#allocation2 + $0x20] sm:$0xff] %vm143, %v124
    %147 = vst.msk [vmem:[#allocation2 + $0x30] sm:$0xff] %vm143, %v126
    %148 = vst.msk [vmem:[#allocation2 + $0x40] sm:$0xff] %vm143, %v128
    %149 = vst.msk [vmem:[#allocation2 + $0x50] sm:$0xff] %vm143, %v130
    %150 = vst.msk [vmem:[#allocation2 + $0x60] sm:$0xff] %vm143, %v132
    %151 = vst.msk [vmem:[#allocation2 + $0x70] sm:$0xff] %vm143, %v134
    %152 = vst.msk [vmem:[#allocation2 + $0x8] sm:$0xff] %vm28, %v37
    %153 = vst.msk [vmem:[#allocation2 + $0x18] sm:$0xff] %vm28, %v38
    %154 = vst.msk [vmem:[#allocation2 + $0x28] sm:$0xff] %vm28, %v39
    %155 = vst.msk [vmem:[#allocation2 + $0x38] sm:$0xff] %vm28, %v40
    %156 = vst.msk [vmem:[#allocation2 + $0x48] sm:$0xff] %vm28, %v41
    %157 = vst.msk [vmem:[#allocation2 + $0x58] sm:$0xff] %vm28, %v42
    %158 = vst.msk [vmem:[#allocation2 + $0x68] sm:$0xff] %vm28, %v43
    %159 = vst.msk [vmem:[#allocation2 + $0x78] sm:$0xff] %vm28, %v44
    %vm160 = vcmask 523264
    %v162 = vsel %vm160, %v12, 0
    %v165 = vsel %vm160, %v13, 0
    %v168 = vsel %vm160, %v14, 0
    %v171 = vsel %vm160, %v15, 0
    %v174 = vsel %vm160, %v16, 0
    %v177 = vsel %vm160, %v17, 0
    %v180 = vsel %vm160, %v18, 0
    %v183 = vsel %vm160, %v19, 0
    %185 = vmatprep.subr.mxu0 0.0
    %186 = vmatpush1.msra.mxu0 %v20
    %187 = vmatprep.subr.mxu0 0.0
    %188 = vmatpush1.msra.mxu0 %v21
    %189 = vmatprep.subr.mxu0 0.0
    %190 = vmatpush1.msra.mxu0 %v22
    %191 = vmatprep.subr.mxu0 0.0
    %192 = vmatpush1.msra.mxu0 %v23
    %193 = vmatprep.subr.mxu0 0.0
    %194 = vmatpush1.msra.mxu0 %v24
    %195 = vmatprep.subr.mxu0 0.0
    %196 = vmatpush1.msra.mxu0 %v25
    %197 = vmatprep.subr.mxu0 0.0
    %198 = vmatpush1.msra.mxu0 %v26
    %199 = vmatprep.subr.mxu0 0.0
    %200 = vmatpush1.msra.mxu0 %v27
    %201 = vmatprep.subr.mxu0 0.0
    %202 = vmatpush1.msra.mxu0 0.0
    %203 = vmatprep.subr.mxu0 0.0
    %204 = vmatpush1.msra.mxu0 0.0
    %205 = vmatprep.subr.mxu0 0.0
    %206 = vmatpush1.msra.mxu0 0.0
    %207 = vmatprep.subr.mxu0 0.0
    %208 = vmatpush1.msra.mxu0 0.0
    %209 = vmatprep.subr.mxu0 0.0
    %210 = vmatpush1.msra.mxu0 0.0
    %211 = vmatprep.subr.mxu0 0.0
    %212 = vmatpush1.msra.mxu0 0.0
    %213 = vmatprep.subr.mxu0 0.0
    %214 = vmatpush1.msra.mxu0 0.0
    %215 = vmatprep.subr.mxu0 0.0
    %216 = vmatpush1.msra.mxu0 0.0
    %217 = vmatprep.subr.mxu0 0.0
    %218 = vmatpush1.msra.mxu0 0.0
    %219 = vmatprep.subr.mxu0 0.0
    %220 = vmatpush1.msra.mxu0 0.0
    %221 = vmatprep.subr.mxu0 0.0
    %222 = vmatpush1.msra.mxu0 0.0
    %223 = vmatprep.subr.mxu0 0.0
    %224 = vmatpush1.msra.mxu0 0.0
    %225 = vmatprep.subr.mxu0 0.0
    %226 = vmatpush1.msra.mxu0 0.0
    %227 = vmatprep.subr.mxu0 0.0
    %228 = vmatpush1.msra.mxu0 0.0
    %229 = vmatprep.subr.mxu0 0.0
    %230 = vmatpush1.msra.mxu0 0.0
    %231 = vmatprep.subr.mxu0 0.0
    %232 = vmatpush1.msra.mxu0 0.0
    %233 = vmatprep.subr.mxu0 0.0
    %234 = vmatpush1.msra.mxu0 0.0
    %235 = vmatprep.subr.mxu0 0.0
    %236 = vmatpush1.msra.mxu0 0.0
    %237 = vmatprep.subr.mxu0 0.0
    %238 = vmatpush1.msra.mxu0 0.0
    %239 = vmatprep.subr.mxu0 0.0
    %240 = vmatpush1.msra.mxu0 0.0
    %241 = vmatprep.subr.mxu0 0.0
    %242 = vmatpush1.msra.mxu0 0.0
    %243 = vmatprep.subr.mxu0 0.0
    %244 = vmatpush1.msra.mxu0 0.0
    %245 = vmatprep.subr.mxu0 0.0
    %246 = vmatpush1.msra.mxu0 0.0
    %247 = vmatprep.subr.mxu0 0.0
    %248 = vmatpush1.msra.mxu0 0.0
    %249 = vmatprep.mubr.f32.mxu0 0.0
    %250 = vmatmul.mubr.f32.gmra.mrb[0].mxu0 %v162
    %v251 = vpop.f32.mrb[0].mxu0
    %v252 = vadd.f32 0.0, %v251
    %v253 = vpop.f32.mrb[0].mxu0
    %254 = vmatprep.mubr.f32.mxu0 0.0
    %255 = vmatmul.mubr.f32.gmra.mrb[0].mxu0 %v165
    %v256 = vpop.f32.mrb[0].mxu0
    %v257 = vadd.f32 0.0, %v256
    %v258 = vpop.f32.mrb[0].mxu0
    %259 = vmatprep.mubr.f32.mxu0 0.0
    %260 = vmatmul.mubr.f32.gmra.mrb[0].mxu0 %v168
    %v261 = vpop.f32.mrb[0].mxu0
    %v262 = vadd.f32 0.0, %v261
    %v263 = vpop.f32.mrb[0].mxu0
    %264 = vmatprep.mubr.f32.mxu0 0.0
    %265 = vmatmul.mubr.f32.gmra.mrb[0].mxu0 %v171
    %v266 = vpop.f32.mrb[0].mxu0
    %v267 = vadd.f32 0.0, %v266
    %v268 = vpop.f32.mrb[0].mxu0
    %269 = vmatprep.mubr.f32.mxu0 0.0
    %270 = vmatmul.mubr.f32.gmra.mrb[0].mxu0 %v174
    %v271 = vpop.f32.mrb[0].mxu0
    %v272 = vadd.f32 0.0, %v271
    %v273 = vpop.f32.mrb[0].mxu0
    %274 = vmatprep.mubr.f32.mxu0 0.0
    %275 = vmatmul.mubr.f32.gmra.mrb[0].mxu0 %v177
    %v276 = vpop.f32.mrb[0].mxu0
    %v277 = vadd.f32 0.0, %v276
    %v278 = vpop.f32.mrb[0].mxu0
    %279 = vmatprep.mubr.f32.mxu0 0.0
    %280 = vmatmul.mubr.f32.gmra.mrb[0].mxu0 %v180
    %v281 = vpop.f32.mrb[0].mxu0
    %v282 = vadd.f32 0.0, %v281
    %v283 = vpop.f32.mrb[0].mxu0
    %284 = vmatprep.mubr.f32.mxu0 0.0
    %285 = vmatmul.mubr.f32.gmra.mrb[0].mxu0 %v183
    %v286 = vpop.f32.mrb[0].mxu0
    %v287 = vadd.f32 0.0, %v286
    %v288 = vpop.f32.mrb[0].mxu0
    %289 = vdwg.mxu0
    %v290 = vld [vmem:[#allocation2] sm:$0xff]
    %v291 = vld [vmem:[#allocation2 + $0x10] sm:$0xff]
    %v292 = vld [vmem:[#allocation2 + $0x20] sm:$0xff]
    %v293 = vld [vmem:[#allocation2 + $0x30] sm:$0xff]
    %v294 = vld [vmem:[#allocation2 + $0x40] sm:$0xff]
    %v295 = vld [vmem:[#allocation2 + $0x50] sm:$0xff]
    %v296 = vld [vmem:[#allocation2 + $0x60] sm:$0xff]
    %v297 = vld [vmem:[#allocation2 + $0x70] sm:$0xff]
    %v298 = vmul.f32 %v252, -4.0
    %v299 = vmul.f32 %v257, -4.0
    %v300 = vmul.f32 %v262, -4.0
    %v301 = vmul.f32 %v267, -4.0
    %v302 = vmul.f32 %v272, -4.0
    %v303 = vmul.f32 %v277, -4.0
    %v304 = vmul.f32 %v282, -4.0
    %v305 = vmul.f32 %v287, -4.0
    %v306 = vadd.f32 %v290, %v298
    %v307 = vadd.f32 %v291, %v299
    %v308 = vadd.f32 %v292, %v300
    %v309 = vadd.f32 %v293, %v301
    %v310 = vadd.f32 %v294, %v302
    %v311 = vadd.f32 %v295, %v303
    %v312 = vadd.f32 %v296, %v304
    %v313 = vadd.f32 %v297, %v305
    %314 = vst.msk [vmem:[#allocation2] sm:$0xff] %vm28, %v306
    %315 = vst.msk [vmem:[#allocation2 + $0x10] sm:$0xff] %vm28, %v307
    %316 = vst.msk [vmem:[#allocation2 + $0x20] sm:$0xff] %vm28, %v308
    %317 = vst.msk [vmem:[#allocation2 + $0x30] sm:$0xff] %vm28, %v309
    %318 = vst.msk [vmem:[#allocation2 + $0x40] sm:$0xff] %vm28, %v310
    %319 = vst.msk [vmem:[#allocation2 + $0x50] sm:$0xff] %vm28, %v311
    %320 = vst.msk [vmem:[#allocation2 + $0x60] sm:$0xff] %vm28, %v312
    %321 = vst.msk [vmem:[#allocation2 + $0x70] sm:$0xff] %vm28, %v313
    %v322 = vld [vmem:[#allocation2] sm:$0xff]
    %v323 = vld [vmem:[#allocation2 + $0x10] sm:$0xff]
    %v324 = vld [vmem:[#allocation2 + $0x20] sm:$0xff]
    %v325 = vld [vmem:[#allocation2 + $0x30] sm:$0xff]
    %v326 = vld [vmem:[#allocation2 + $0x40] sm:$0xff]
    %v327 = vld [vmem:[#allocation2 + $0x50] sm:$0xff]
    %v328 = vld [vmem:[#allocation2 + $0x60] sm:$0xff]
    %v329 = vld [vmem:[#allocation2 + $0x70] sm:$0xff]
    %v330 = vmul.f32 %v252, 4.0
    %v331 = vmul.f32 %v257, 4.0
    %v332 = vmul.f32 %v262, 4.0
    %v333 = vmul.f32 %v267, 4.0
    %v334 = vmul.f32 %v272, 4.0
    %v335 = vmul.f32 %v277, 4.0
    %v336 = vmul.f32 %v282, 4.0
    %v337 = vmul.f32 %v287, 4.0
    %346 = vrot.lane.b32.xlu0 %v330, 32
    %v347 = vpop.permute.xlu0 %346
    %348 = vrot.lane.b32.xlu0 %v331, 32
    %v349 = vpop.permute.xlu0 %348
    %350 = vrot.lane.b32.xlu0 %v332, 32
    %v351 = vpop.permute.xlu0 %350
    %352 = vrot.lane.b32.xlu0 %v333, 32
    %v353 = vpop.permute.xlu0 %352
    %354 = vrot.lane.b32.xlu0 %v334, 32
    %v355 = vpop.permute.xlu0 %354
    %356 = vrot.lane.b32.xlu0 %v335, 32
    %v357 = vpop.permute.xlu0 %356
    %358 = vrot.lane.b32.xlu0 %v336, 32
    %v359 = vpop.permute.xlu0 %358
    %360 = vrot.lane.b32.xlu0 %v337, 32
    %v361 = vpop.permute.xlu0 %360
    %v370 = vadd.f32 %v322, %v347
    %v371 = vadd.f32 %v323, %v349
    %v372 = vadd.f32 %v324, %v351
    %v373 = vadd.f32 %v325, %v353
    %v374 = vadd.f32 %v326, %v355
    %v375 = vadd.f32 %v327, %v357
    %v376 = vadd.f32 %v328, %v359
    %v377 = vadd.f32 %v329, %v361
    %378 = vst.msk [vmem:[#allocation2] sm:$0xff] %vm77, %v370
    %379 = vst.msk [vmem:[#allocation2 + $0x10] sm:$0xff] %vm77, %v371
    %380 = vst.msk [vmem:[#allocation2 + $0x20] sm:$0xff] %vm77, %v372
    %381 = vst.msk [vmem:[#allocation2 + $0x30] sm:$0xff] %vm77, %v373
    %382 = vst.msk [vmem:[#allocation2 + $0x40] sm:$0xff] %vm77, %v374
    %383 = vst.msk [vmem:[#allocation2 + $0x50] sm:$0xff] %vm77, %v375
    %384 = vst.msk [vmem:[#allocation2 + $0x60] sm:$0xff] %vm77, %v376
    %385 = vst.msk [vmem:[#allocation2 + $0x70] sm:$0xff] %vm77, %v377
    %386 = vmatprep.subr.mxu0 0.0
    %387 = vmatpush1.msra.mxu0 %v252
    %388 = vmatprep.subr.mxu0 0.0
    %389 = vmatpush1.msra.mxu0 %v257
    %390 = vmatprep.subr.mxu0 0.0
    %391 = vmatpush1.msra.mxu0 %v262
    %392 = vmatprep.subr.mxu0 0.0
    %393 = vmatpush1.msra.mxu0 %v267
    %394 = vmatprep.subr.mxu0 0.0
    %395 = vmatpush1.msra.mxu0 %v272
    %396 = vmatprep.subr.mxu0 0.0
    %397 = vmatpush1.msra.mxu0 %v277
    %398 = vmatprep.subr.mxu0 0.0
    %399 = vmatpush1.msra.mxu0 %v282
    %400 = vmatprep.subr.mxu0 0.0
    %401 = vmatpush1.msra.mxu0 %v287
    %402 = vmatprep.subr.mxu0 0.0
    %403 = vmatpush1.msra.mxu0 0.0
    %404 = vmatprep.subr.mxu0 0.0
    %405 = vmatpush1.msra.mxu0 0.0
    %406 = vmatprep.subr.mxu0 0.0
    %407 = vmatpush1.msra.mxu0 0.0
    %408 = vmatprep.subr.mxu0 0.0
    %409 = vmatpush1.msra.mxu0 0.0
    %410 = vmatprep.subr.mxu0 0.0
    %411 = vmatpush1.msra.mxu0 0.0
    %412 = vmatprep.subr.mxu0 0.0
    %413 = vmatpush1.msra.mxu0 0.0
    %414 = vmatprep.subr.mxu0 0.0
    %415 = vmatpush1.msra.mxu0 0.0
    %416 = vmatprep.subr.mxu0 0.0
    %417 = vmatpush1.msra.mxu0 0.0
    %418 = vmatprep.subr.mxu0 0.0
    %419 = vmatpush1.msra.mxu0 0.0
    %420 = vmatprep.subr.mxu0 0.0
    %421 = vmatpush1.msra.mxu0 0.0
    %422 = vmatprep.subr.mxu0 0.0
    %423 = vmatpush1.msra.mxu0 0.0
    %424 = vmatprep.subr.mxu0 0.0
    %425 = vmatpush1.msra.mxu0 0.0
    %426 = vmatprep.subr.mxu0 0.0
    %427 = vmatpush1.msra.mxu0 0.0
    %428 = vmatprep.subr.mxu0 0.0
    %429 = vmatpush1.msra.mxu0 0.0
    %430 = vmatprep.subr.mxu0 0.0
    %431 = vmatpush1.msra.mxu0 0.0
    %432 = vmatprep.subr.mxu0 0.0
    %433 = vmatpush1.msra.mxu0 0.0
    %434 = vmatprep.subr.mxu0 0.0
    %435 = vmatpush1.msra.mxu0 0.0
    %436 = vmatprep.subr.mxu0 0.0
    %437 = vmatpush1.msra.mxu0 0.0
    %438 = vmatprep.subr.mxu0 0.0
    %439 = vmatpush1.msra.mxu0 0.0
    %440 = vmatprep.subr.mxu0 0.0
    %441 = vmatpush1.msra.mxu0 0.0
    %442 = vmatprep.subr.mxu0 0.0
    %443 = vmatpush1.msra.mxu0 0.0
    %444 = vmatprep.subr.mxu0 0.0
    %445 = vmatpush1.msra.mxu0 0.0
    %446 = vmatprep.subr.mxu0 0.0
    %447 = vmatpush1.msra.mxu0 0.0
    %448 = vmatprep.subr.mxu0 0.0
    %449 = vmatpush1.msra.mxu0 0.0
    %450 = vmatprep.mubr.f32.mxu0 0.0
    %451 = vmatmul.mubr.f32.gmra.mrb[0].mxu0 %v162
    %v452 = vpop.f32.mrb[0].mxu0
    %v453 = vadd.f32 0.0, %v452
    %v454 = vpop.f32.mrb[0].mxu0
    %455 = vmatprep.mubr.f32.mxu0 0.0
    %456 = vmatmul.mubr.f32.gmra.mrb[0].mxu0 %v165
    %v457 = vpop.f32.mrb[0].mxu0
    %v458 = vadd.f32 0.0, %v457
    %v459 = vpop.f32.mrb[0].mxu0
    %460 = vmatprep.mubr.f32.mxu0 0.0
    %461 = vmatmul.mubr.f32.gmra.mrb[0].mxu0 %v168
    %v462 = vpop.f32.mrb[0].mxu0
    %v463 = vadd.f32 0.0, %v462
    %v464 = vpop.f32.mrb[0].mxu0
    %465 = vmatprep.mubr.f32.mxu0 0.0
    %466 = vmatmul.mubr.f32.gmra.mrb[0].mxu0 %v171
    %v467 = vpop.f32.mrb[0].mxu0
    %v468 = vadd.f32 0.0, %v467
    %v469 = vpop.f32.mrb[0].mxu0
    %470 = vmatprep.mubr.f32.mxu0 0.0
    %471 = vmatmul.mubr.f32.gmra.mrb[0].mxu0 %v174
    %v472 = vpop.f32.mrb[0].mxu0
    %v473 = vadd.f32 0.0, %v472
    %v474 = vpop.f32.mrb[0].mxu0
    %475 = vmatprep.mubr.f32.mxu0 0.0
    %476 = vmatmul.mubr.f32.gmra.mrb[0].mxu0 %v177
    %v477 = vpop.f32.mrb[0].mxu0
    %v478 = vadd.f32 0.0, %v477
    %v479 = vpop.f32.mrb[0].mxu0
    %480 = vmatprep.mubr.f32.mxu0 0.0
    %481 = vmatmul.mubr.f32.gmra.mrb[0].mxu0 %v180
    %v482 = vpop.f32.mrb[0].mxu0
    %v483 = vadd.f32 0.0, %v482
    %v484 = vpop.f32.mrb[0].mxu0
    %485 = vmatprep.mubr.f32.mxu0 0.0
    %486 = vmatmul.mubr.f32.gmra.mrb[0].mxu0 %v183
    %v487 = vpop.f32.mrb[0].mxu0
    %v488 = vadd.f32 0.0, %v487
    %v489 = vpop.f32.mrb[0].mxu0
    %490 = vdwg.mxu0
    %v491 = vld [vmem:[#allocation2] sm:$0xff]
    %v492 = vld [vmem:[#allocation2 + $0x10] sm:$0xff]
    %v493 = vld [vmem:[#allocation2 + $0x20] sm:$0xff]
    %v494 = vld [vmem:[#allocation2 + $0x30] sm:$0xff]
    %v495 = vld [vmem:[#allocation2 + $0x40] sm:$0xff]
    %v496 = vld [vmem:[#allocation2 + $0x50] sm:$0xff]
    %v497 = vld [vmem:[#allocation2 + $0x60] sm:$0xff]
    %v498 = vld [vmem:[#allocation2 + $0x70] sm:$0xff]
    %v499 = vmul.f32 %v453, 6.0
    %v500 = vmul.f32 %v458, 6.0
    %v501 = vmul.f32 %v463, 6.0
    %v502 = vmul.f32 %v468, 6.0
    %v503 = vmul.f32 %v473, 6.0
    %v504 = vmul.f32 %v478, 6.0
    %v505 = vmul.f32 %v483, 6.0
    %v506 = vmul.f32 %v488, 6.0
    %v507 = vadd.f32 %v491, %v499
    %v508 = vadd.f32 %v492, %v500
    %v509 = vadd.f32 %v493, %v501
    %v510 = vadd.f32 %v494, %v502
    %v511 = vadd.f32 %v495, %v503
    %v512 = vadd.f32 %v496, %v504
    %v513 = vadd.f32 %v497, %v505
    %v514 = vadd.f32 %v498, %v506
    %515 = vst.msk [vmem:[#allocation2] sm:$0xff] %vm28, %v507
    %516 = vst.msk [vmem:[#allocation2 + $0x10] sm:$0xff] %vm28, %v508
    %517 = vst.msk [vmem:[#allocation2 + $0x20] sm:$0xff] %vm28, %v509
    %518 = vst.msk [vmem:[#allocation2 + $0x30] sm:$0xff] %vm28, %v510
    %519 = vst.msk [vmem:[#allocation2 + $0x40] sm:$0xff] %vm28, %v511
    %520 = vst.msk [vmem:[#allocation2 + $0x50] sm:$0xff] %vm28, %v512
    %521 = vst.msk [vmem:[#allocation2 + $0x60] sm:$0xff] %vm28, %v513
    %522 = vst.msk [vmem:[#allocation2 + $0x70] sm:$0xff] %vm28, %v514
    %v523 = vld [vmem:[#allocation2] sm:$0xff]
    %v524 = vld [vmem:[#allocation2 + $0x10] sm:$0xff]
    %v525 = vld [vmem:[#allocation2 + $0x20] sm:$0xff]
    %v526 = vld [vmem:[#allocation2 + $0x30] sm:$0xff]
    %v527 = vld [vmem:[#allocation2 + $0x40] sm:$0xff]
    %v528 = vld [vmem:[#allocation2 + $0x50] sm:$0xff]
    %v529 = vld [vmem:[#allocation2 + $0x60] sm:$0xff]
    %v530 = vld [vmem:[#allocation2 + $0x70] sm:$0xff]
    %v531 = vmul.f32 %v453, -12.0
    %v532 = vmul.f32 %v458, -12.0
    %v533 = vmul.f32 %v463, -12.0
    %v534 = vmul.f32 %v468, -12.0
    %v535 = vmul.f32 %v473, -12.0
    %v536 = vmul.f32 %v478, -12.0
    %v537 = vmul.f32 %v483, -12.0
    %v538 = vmul.f32 %v488, -12.0
    %547 = vrot.lane.b32.xlu0 %v531, 32
    %v548 = vpop.permute.xlu0 %547
    %549 = vrot.lane.b32.xlu0 %v532, 32
    %v550 = vpop.permute.xlu0 %549
    %551 = vrot.lane.b32.xlu0 %v533, 32
    %v552 = vpop.permute.xlu0 %551
    %553 = vrot.lane.b32.xlu0 %v534, 32
    %v554 = vpop.permute.xlu0 %553
    %555 = vrot.lane.b32.xlu0 %v535, 32
    %v556 = vpop.permute.xlu0 %555
    %557 = vrot.lane.b32.xlu0 %v536, 32
    %v558 = vpop.permute.xlu0 %557
    %559 = vrot.lane.b32.xlu0 %v537, 32
    %v560 = vpop.permute.xlu0 %559
    %561 = vrot.lane.b32.xlu0 %v538, 32
    %v562 = vpop.permute.xlu0 %561
    %v571 = vadd.f32 %v523, %v548
    %v572 = vadd.f32 %v524, %v550
    %v573 = vadd.f32 %v525, %v552
    %v574 = vadd.f32 %v526, %v554
    %v575 = vadd.f32 %v527, %v556
    %v576 = vadd.f32 %v528, %v558
    %v577 = vadd.f32 %v529, %v560
    %v578 = vadd.f32 %v530, %v562
    %579 = vst.msk [vmem:[#allocation2] sm:$0xff] %vm77, %v571
    %580 = vst.msk [vmem:[#allocation2 + $0x10] sm:$0xff] %vm77, %v572
    %581 = vst.msk [vmem:[#allocation2 + $0x20] sm:$0xff] %vm77, %v573
    %582 = vst.msk [vmem:[#allocation2 + $0x30] sm:$0xff] %vm77, %v574
    %583 = vst.msk [vmem:[#allocation2 + $0x40] sm:$0xff] %vm77, %v575
    %584 = vst.msk [vmem:[#allocation2 + $0x50] sm:$0xff] %vm77, %v576
    %585 = vst.msk [vmem:[#allocation2 + $0x60] sm:$0xff] %vm77, %v577
    %586 = vst.msk [vmem:[#allocation2 + $0x70] sm:$0xff] %vm77, %v578
    %v587 = vld [vmem:[#allocation2] sm:$0xff]
    %v588 = vld [vmem:[#allocation2 + $0x10] sm:$0xff]
    %v589 = vld [vmem:[#allocation2 + $0x20] sm:$0xff]
    %v590 = vld [vmem:[#allocation2 + $0x30] sm:$0xff]
    %v591 = vld [vmem:[#allocation2 + $0x40] sm:$0xff]
    %v592 = vld [vmem:[#allocation2 + $0x50] sm:$0xff]
    %v593 = vld [vmem:[#allocation2 + $0x60] sm:$0xff]
    %v594 = vld [vmem:[#allocation2 + $0x70] sm:$0xff]
    %603 = vrot.lane.b32.xlu0 %v499, 64
    %v604 = vpop.permute.xlu0 %603
    %605 = vrot.lane.b32.xlu0 %v500, 64
    %v606 = vpop.permute.xlu0 %605
    %607 = vrot.lane.b32.xlu0 %v501, 64
    %v608 = vpop.permute.xlu0 %607
    %609 = vrot.lane.b32.xlu0 %v502, 64
    %v610 = vpop.permute.xlu0 %609
    %611 = vrot.lane.b32.xlu0 %v503, 64
    %v612 = vpop.permute.xlu0 %611
    %613 = vrot.lane.b32.xlu0 %v504, 64
    %v614 = vpop.permute.xlu0 %613
    %615 = vrot.lane.b32.xlu0 %v505, 64
    %v616 = vpop.permute.xlu0 %615
    %617 = vrot.lane.b32.xlu0 %v506, 64
    %v618 = vpop.permute.xlu0 %617
    %v627 = vadd.f32 %v587, %v604
    %v628 = vadd.f32 %v588, %v606
    %v629 = vadd.f32 %v589, %v608
    %v630 = vadd.f32 %v590, %v610
    %v631 = vadd.f32 %v591, %v612
    %v632 = vadd.f32 %v592, %v614
    %v633 = vadd.f32 %v593, %v616
    %v634 = vadd.f32 %v594, %v618
    %635 = vst.msk [vmem:[#allocation2] sm:$0xff] %vm110, %v627
    %636 = vst.msk [vmem:[#allocation2 + $0x10] sm:$0xff] %vm110, %v628
    %637 = vst.msk [vmem:[#allocation2 + $0x20] sm:$0xff] %vm110, %v629
    %638 = vst.msk [vmem:[#allocation2 + $0x30] sm:$0xff] %vm110, %v630
    %639 = vst.msk [vmem:[#allocation2 + $0x40] sm:$0xff] %vm110, %v631
    %640 = vst.msk [vmem:[#allocation2 + $0x50] sm:$0xff] %vm110, %v632
    %641 = vst.msk [vmem:[#allocation2 + $0x60] sm:$0xff] %vm110, %v633
    %642 = vst.msk [vmem:[#allocation2 + $0x70] sm:$0xff] %vm110, %v634
    %643 = vmatprep.subr.mxu0 0.0
    %644 = vmatpush1.msra.mxu0 %v453
    %645 = vmatprep.subr.mxu0 0.0
    %646 = vmatpush1.msra.mxu0 %v458
    %647 = vmatprep.subr.mxu0 0.0
    %648 = vmatpush1.msra.mxu0 %v463
    %649 = vmatprep.subr.mxu0 0.0
    %650 = vmatpush1.msra.mxu0 %v468
    %651 = vmatprep.subr.mxu0 0.0
    %652 = vmatpush1.msra.mxu0 %v473
    %653 = vmatprep.subr.mxu0 0.0
    %654 = vmatpush1.msra.mxu0 %v478
    %655 = vmatprep.subr.mxu0 0.0
    %656 = vmatpush1.msra.mxu0 %v483
    %657 = vmatprep.subr.mxu0 0.0
    %658 = vmatpush1.msra.mxu0 %v488
    %659 = vmatprep.subr.mxu0 0.0
    %660 = vmatpush1.msra.mxu0 0.0
    %661 = vmatprep.subr.mxu0 0.0
    %662 = vmatpush1.msra.mxu0 0.0
    %663 = vmatprep.subr.mxu0 0.0
    %664 = vmatpush1.msra.mxu0 0.0
    %665 = vmatprep.subr.mxu0 0.0
    %666 = vmatpush1.msra.mxu0 0.0
    %667 = vmatprep.subr.mxu0 0.0
    %668 = vmatpush1.msra.mxu0 0.0
    %669 = vmatprep.subr.mxu0 0.0
    %670 = vmatpush1.msra.mxu0 0.0
    %671 = vmatprep.subr.mxu0 0.0
    %672 = vmatpush1.msra.mxu0 0.0
    %673 = vmatprep.subr.mxu0 0.0
    %674 = vmatpush1.msra.mxu0 0.0
    %675 = vmatprep.subr.mxu0 0.0
    %676 = vmatpush1.msra.mxu0 0.0
    %677 = vmatprep.subr.mxu0 0.0
    %678 = vmatpush1.msra.mxu0 0.0
    %679 = vmatprep.subr.mxu0 0.0
    %680 = vmatpush1.msra.mxu0 0.0
    %681 = vmatprep.subr.mxu0 0.0
    %682 = vmatpush1.msra.mxu0 0.0
    %683 = vmatprep.subr.mxu0 0.0
    %684 = vmatpush1.msra.mxu0 0.0
    %685 = vmatprep.subr.mxu0 0.0
    %686 = vmatpush1.msra.mxu0 0.0
    %687 = vmatprep.subr.mxu0 0.0
    %688 = vmatpush1.msra.mxu0 0.0
    %689 = vmatprep.subr.mxu0 0.0
    %690 = vmatpush1.msra.mxu0 0.0
    %691 = vmatprep.subr.mxu0 0.0
    %692 = vmatpush1.msra.mxu0 0.0
    %693 = vmatprep.subr.mxu0 0.0
    %694 = vmatpush1.msra.mxu0 0.0
    %695 = vmatprep.subr.mxu0 0.0
    %696 = vmatpush1.msra.mxu0 0.0
    %697 = vmatprep.subr.mxu0 0.0
    %698 = vmatpush1.msra.mxu0 0.0
    %699 = vmatprep.subr.mxu0 0.0
    %700 = vmatpush1.msra.mxu0 0.0
    %701 = vmatprep.subr.mxu0 0.0
    %702 = vmatpush1.msra.mxu0 0.0
    %703 = vmatprep.subr.mxu0 0.0
    %704 = vmatpush1.msra.mxu0 0.0
    %705 = vmatprep.subr.mxu0 0.0
    %706 = vmatpush1.msra.mxu0 0.0
    %707 = vmatprep.mubr.f32.mxu0 0.0
    %708 = vmatmul.mubr.f32.gmra.mrb[0].mxu0 %v162
    %v709 = vpop.f32.mrb[0].mxu0
    %v710 = vadd.f32 0.0, %v709
    %v711 = vpop.f32.mrb[0].mxu0
    %712 = vmatprep.mubr.f32.mxu0 0.0
    %713 = vmatmul.mubr.f32.gmra.mrb[0].mxu0 %v165
    %v714 = vpop.f32.mrb[0].mxu0
    %v715 = vadd.f32 0.0, %v714
    %v716 = vpop.f32.mrb[0].mxu0
    %717 = vmatprep.mubr.f32.mxu0 0.0
    %718 = vmatmul.mubr.f32.gmra.mrb[0].mxu0 %v168
    %v719 = vpop.f32.mrb[0].mxu0
    %v720 = vadd.f32 0.0, %v719
    %v721 = vpop.f32.mrb[0].mxu0
    %722 = vmatprep.mubr.f32.mxu0 0.0
    %723 = vmatmul.mubr.f32.gmra.mrb[0].mxu0 %v171
    %v724 = vpop.f32.mrb[0].mxu0
    %v725 = vadd.f32 0.0, %v724
    %v726 = vpop.f32.mrb[0].mxu0
    %727 = vmatprep.mubr.f32.mxu0 0.0
    %728 = vmatmul.mubr.f32.gmra.mrb[0].mxu0 %v174
    %v729 = vpop.f32.mrb[0].mxu0
    %v730 = vadd.f32 0.0, %v729
    %v731 = vpop.f32.mrb[0].mxu0
    %732 = vmatprep.mubr.f32.mxu0 0.0
    %733 = vmatmul.mubr.f32.gmra.mrb[0].mxu0 %v177
    %v734 = vpop.f32.mrb[0].mxu0
    %v735 = vadd.f32 0.0, %v734
    %v736 = vpop.f32.mrb[0].mxu0
    %737 = vmatprep.mubr.f32.mxu0 0.0
    %738 = vmatmul.mubr.f32.gmra.mrb[0].mxu0 %v180
    %v739 = vpop.f32.mrb[0].mxu0
    %v740 = vadd.f32 0.0, %v739
    %v741 = vpop.f32.mrb[0].mxu0
    %742 = vmatprep.mubr.f32.mxu0 0.0
    %743 = vmatmul.mubr.f32.gmra.mrb[0].mxu0 %v183
    %v744 = vpop.f32.mrb[0].mxu0
    %v745 = vadd.f32 0.0, %v744
    %v746 = vpop.f32.mrb[0].mxu0
    %747 = vdwg.mxu0
    %v748 = vld [vmem:[#allocation2] sm:$0xff]
    %v749 = vld [vmem:[#allocation2 + $0x10] sm:$0xff]
    %v750 = vld [vmem:[#allocation2 + $0x20] sm:$0xff]
    %v751 = vld [vmem:[#allocation2 + $0x30] sm:$0xff]
    %v752 = vld [vmem:[#allocation2 + $0x40] sm:$0xff]
    %v753 = vld [vmem:[#allocation2 + $0x50] sm:$0xff]
    %v754 = vld [vmem:[#allocation2 + $0x60] sm:$0xff]
    %v755 = vld [vmem:[#allocation2 + $0x70] sm:$0xff]
    %v756 = vmul.f32 %v710, -4.0
    %v757 = vmul.f32 %v715, -4.0
    %v758 = vmul.f32 %v720, -4.0
    %v759 = vmul.f32 %v725, -4.0
    %v760 = vmul.f32 %v730, -4.0
    %v761 = vmul.f32 %v735, -4.0
    %v762 = vmul.f32 %v740, -4.0
    %v763 = vmul.f32 %v745, -4.0
    %v764 = vadd.f32 %v748, %v756
    %v765 = vadd.f32 %v749, %v757
    %v766 = vadd.f32 %v750, %v758
    %v767 = vadd.f32 %v751, %v759
    %v768 = vadd.f32 %v752, %v760
    %v769 = vadd.f32 %v753, %v761
    %v770 = vadd.f32 %v754, %v762
    %v771 = vadd.f32 %v755, %v763
    %772 = vst.msk [vmem:[#allocation2] sm:$0xff] %vm28, %v764
    %773 = vst.msk [vmem:[#allocation2 + $0x10] sm:$0xff] %vm28, %v765
    %774 = vst.msk [vmem:[#allocation2 + $0x20] sm:$0xff] %vm28, %v766
    %775 = vst.msk [vmem:[#allocation2 + $0x30] sm:$0xff] %vm28, %v767
    %776 = vst.msk [vmem:[#allocation2 + $0x40] sm:$0xff] %vm28, %v768
    %777 = vst.msk [vmem:[#allocation2 + $0x50] sm:$0xff] %vm28, %v769
    %778 = vst.msk [vmem:[#allocation2 + $0x60] sm:$0xff] %vm28, %v770
    %779 = vst.msk [vmem:[#allocation2 + $0x70] sm:$0xff] %vm28, %v771
    %v780 = vld [vmem:[#allocation2] sm:$0xff]
    %v781 = vld [vmem:[#allocation2 + $0x10] sm:$0xff]
    %v782 = vld [vmem:[#allocation2 + $0x20] sm:$0xff]
    %v783 = vld [vmem:[#allocation2 + $0x30] sm:$0xff]
    %v784 = vld [vmem:[#allocation2 + $0x40] sm:$0xff]
    %v785 = vld [vmem:[#allocation2 + $0x50] sm:$0xff]
    %v786 = vld [vmem:[#allocation2 + $0x60] sm:$0xff]
    %v787 = vld [vmem:[#allocation2 + $0x70] sm:$0xff]
    %v788 = vmul.f32 %v710, 12.0
    %v789 = vmul.f32 %v715, 12.0
    %v790 = vmul.f32 %v720, 12.0
    %v791 = vmul.f32 %v725, 12.0
    %v792 = vmul.f32 %v730, 12.0
    %v793 = vmul.f32 %v735, 12.0
    %v794 = vmul.f32 %v740, 12.0
    %v795 = vmul.f32 %v745, 12.0
    %804 = vrot.lane.b32.xlu0 %v788, 32
    %v805 = vpop.permute.xlu0 %804
    %806 = vrot.lane.b32.xlu0 %v789, 32
    %v807 = vpop.permute.xlu0 %806
    %808 = vrot.lane.b32.xlu0 %v790, 32
    %v809 = vpop.permute.xlu0 %808
    %810 = vrot.lane.b32.xlu0 %v791, 32
    %v811 = vpop.permute.xlu0 %810
    %812 = vrot.lane.b32.xlu0 %v792, 32
    %v813 = vpop.permute.xlu0 %812
    %814 = vrot.lane.b32.xlu0 %v793, 32
    %v815 = vpop.permute.xlu0 %814
    %816 = vrot.lane.b32.xlu0 %v794, 32
    %v817 = vpop.permute.xlu0 %816
    %818 = vrot.lane.b32.xlu0 %v795, 32
    %v819 = vpop.permute.xlu0 %818
    %v828 = vadd.f32 %v780, %v805
    %v829 = vadd.f32 %v781, %v807
    %v830 = vadd.f32 %v782, %v809
    %v831 = vadd.f32 %v783, %v811
    %v832 = vadd.f32 %v784, %v813
    %v833 = vadd.f32 %v785, %v815
    %v834 = vadd.f32 %v786, %v817
    %v835 = vadd.f32 %v787, %v819
    %836 = vst.msk [vmem:[#allocation2] sm:$0xff] %vm77, %v828
    %837 = vst.msk [vmem:[#allocation2 + $0x10] sm:$0xff] %vm77, %v829
    %838 = vst.msk [vmem:[#allocation2 + $0x20] sm:$0xff] %vm77, %v830
    %839 = vst.msk [vmem:[#allocation2 + $0x30] sm:$0xff] %vm77, %v831
    %840 = vst.msk [vmem:[#allocation2 + $0x40] sm:$0xff] %vm77, %v832
    %841 = vst.msk [vmem:[#allocation2 + $0x50] sm:$0xff] %vm77, %v833
    %842 = vst.msk [vmem:[#allocation2 + $0x60] sm:$0xff] %vm77, %v834
    %843 = vst.msk [vmem:[#allocation2 + $0x70] sm:$0xff] %vm77, %v835
    %v844 = vld [vmem:[#allocation2] sm:$0xff]
    %v845 = vld [vmem:[#allocation2 + $0x10] sm:$0xff]
    %v846 = vld [vmem:[#allocation2 + $0x20] sm:$0xff]
    %v847 = vld [vmem:[#allocation2 + $0x30] sm:$0xff]
    %v848 = vld [vmem:[#allocation2 + $0x40] sm:$0xff]
    %v849 = vld [vmem:[#allocation2 + $0x50] sm:$0xff]
    %v850 = vld [vmem:[#allocation2 + $0x60] sm:$0xff]
    %v851 = vld [vmem:[#allocation2 + $0x70] sm:$0xff]
    %v852 = vmul.f32 %v710, -12.0
    %v853 = vmul.f32 %v715, -12.0
    %v854 = vmul.f32 %v720, -12.0
    %v855 = vmul.f32 %v725, -12.0
    %v856 = vmul.f32 %v730, -12.0
    %v857 = vmul.f32 %v735, -12.0
    %v858 = vmul.f32 %v740, -12.0
    %v859 = vmul.f32 %v745, -12.0
    %868 = vrot.lane.b32.xlu0 %v852, 64
    %v869 = vpop.permute.xlu0 %868
    %870 = vrot.lane.b32.xlu0 %v853, 64
    %v871 = vpop.permute.xlu0 %870
    %872 = vrot.lane.b32.xlu0 %v854, 64
    %v873 = vpop.permute.xlu0 %872
    %874 = vrot.lane.b32.xlu0 %v855, 64
    %v875 = vpop.permute.xlu0 %874
    %876 = vrot.lane.b32.xlu0 %v856, 64
    %v877 = vpop.permute.xlu0 %876
    %878 = vrot.lane.b32.xlu0 %v857, 64
    %v879 = vpop.permute.xlu0 %878
    %880 = vrot.lane.b32.xlu0 %v858, 64
    %v881 = vpop.permute.xlu0 %880
    %882 = vrot.lane.b32.xlu0 %v859, 64
    %v883 = vpop.permute.xlu0 %882
    %v892 = vadd.f32 %v844, %v869
    %v893 = vadd.f32 %v845, %v871
    %v894 = vadd.f32 %v846, %v873
    %v895 = vadd.f32 %v847, %v875
    %v896 = vadd.f32 %v848, %v877
    %v897 = vadd.f32 %v849, %v879
    %v898 = vadd.f32 %v850, %v881
    %v899 = vadd.f32 %v851, %v883
    %900 = vst.msk [vmem:[#allocation2] sm:$0xff] %vm110, %v892
    %901 = vst.msk [vmem:[#allocation2 + $0x10] sm:$0xff] %vm110, %v893
    %902 = vst.msk [vmem:[#allocation2 + $0x20] sm:$0xff] %vm110, %v894
    %903 = vst.msk [vmem:[#allocation2 + $0x30] sm:$0xff] %vm110, %v895
    %904 = vst.msk [vmem:[#allocation2 + $0x40] sm:$0xff] %vm110, %v896
    %905 = vst.msk [vmem:[#allocation2 + $0x50] sm:$0xff] %vm110, %v897
    %906 = vst.msk [vmem:[#allocation2 + $0x60] sm:$0xff] %vm110, %v898
    %907 = vst.msk [vmem:[#allocation2 + $0x70] sm:$0xff] %vm110, %v899
    %v908 = vld [vmem:[#allocation2] sm:$0xff]
    %v909 = vld [vmem:[#allocation2 + $0x10] sm:$0xff]
    %v910 = vld [vmem:[#allocation2 + $0x20] sm:$0xff]
    %v911 = vld [vmem:[#allocation2 + $0x30] sm:$0xff]
    %v912 = vld [vmem:[#allocation2 + $0x40] sm:$0xff]
    %v913 = vld [vmem:[#allocation2 + $0x50] sm:$0xff]
    %v914 = vld [vmem:[#allocation2 + $0x60] sm:$0xff]
    %v915 = vld [vmem:[#allocation2 + $0x70] sm:$0xff]
    %v916 = vmul.f32 %v710, 4.0
    %v917 = vmul.f32 %v715, 4.0
    %v918 = vmul.f32 %v720, 4.0
    %v919 = vmul.f32 %v725, 4.0
    %v920 = vmul.f32 %v730, 4.0
    %v921 = vmul.f32 %v735, 4.0
    %v922 = vmul.f32 %v740, 4.0
    %v923 = vmul.f32 %v745, 4.0
    %932 = vrot.lane.b32.xlu0 %v916, 96
    %v933 = vpop.permute.xlu0 %932
    %934 = vrot.lane.b32.xlu0 %v917, 96
    %v935 = vpop.permute.xlu0 %934
    %936 = vrot.lane.b32.xlu0 %v918, 96
    %v937 = vpop.permute.xlu0 %936
    %938 = vrot.lane.b32.xlu0 %v919, 96
    %v939 = vpop.permute.xlu0 %938
    %940 = vrot.lane.b32.xlu0 %v920, 96
    %v941 = vpop.permute.xlu0 %940
    %942 = vrot.lane.b32.xlu0 %v921, 96
    %v943 = vpop.permute.xlu0 %942
    %944 = vrot.lane.b32.xlu0 %v922, 96
    %v945 = vpop.permute.xlu0 %944
    %946 = vrot.lane.b32.xlu0 %v923, 96
    %v947 = vpop.permute.xlu0 %946
    %v956 = vadd.f32 %v908, %v933
    %v957 = vadd.f32 %v909, %v935
    %v958 = vadd.f32 %v910, %v937
    %v959 = vadd.f32 %v911, %v939
    %v960 = vadd.f32 %v912, %v941
    %v961 = vadd.f32 %v913, %v943
    %v962 = vadd.f32 %v914, %v945
    %v963 = vadd.f32 %v915, %v947
    %964 = vst.msk [vmem:[#allocation2] sm:$0xff] %vm143, %v956
    %965 = vst.msk [vmem:[#allocation2 + $0x10] sm:$0xff] %vm143, %v957
    %966 = vst.msk [vmem:[#allocation2 + $0x20] sm:$0xff] %vm143, %v958
    %967 = vst.msk [vmem:[#allocation2 + $0x30] sm:$0xff] %vm143, %v959
    %968 = vst.msk [vmem:[#allocation2 + $0x40] sm:$0xff] %vm143, %v960
    %969 = vst.msk [vmem:[#allocation2 + $0x50] sm:$0xff] %vm143, %v961
    %970 = vst.msk [vmem:[#allocation2 + $0x60] sm:$0xff] %vm143, %v962
    %971 = vst.msk [vmem:[#allocation2 + $0x70] sm:$0xff] %vm143, %v963
    %972 = vmatprep.subr.mxu0 0.0
    %973 = vmatpush1.msra.mxu0 %v710
    %974 = vmatprep.subr.mxu0 0.0
    %975 = vmatpush1.msra.mxu0 %v715
    %976 = vmatprep.subr.mxu0 0.0
    %977 = vmatpush1.msra.mxu0 %v720
    %978 = vmatprep.subr.mxu0 0.0
    %979 = vmatpush1.msra.mxu0 %v725
    %980 = vmatprep.subr.mxu0 0.0
    %981 = vmatpush1.msra.mxu0 %v730
    %982 = vmatprep.subr.mxu0 0.0
    %983 = vmatpush1.msra.mxu0 %v735
    %984 = vmatprep.subr.mxu0 0.0
    %985 = vmatpush1.msra.mxu0 %v740
    %986 = vmatprep.subr.mxu0 0.0
    %987 = vmatpush1.msra.mxu0 %v745
    %988 = vmatprep.subr.mxu0 0.0
    %989 = vmatpush1.msra.mxu0 0.0
    %990 = vmatprep.subr.mxu0 0.0
    %991 = vmatpush1.msra.mxu0 0.0
    %992 = vmatprep.subr.mxu0 0.0
    %993 = vmatpush1.msra.mxu0 0.0
    %994 = vmatprep.subr.mxu0 0.0
    %995 = vmatpush1.msra.mxu0 0.0
    %996 = vmatprep.subr.mxu0 0.0
    %997 = vmatpush1.msra.mxu0 0.0
    %998 = vmatprep.subr.mxu0 0.0
    %999 = vmatpush1.msra.mxu0 0.0
    %1000 = vmatprep.subr.mxu0 0.0
    %1001 = vmatpush1.msra.mxu0 0.0
    %1002 = vmatprep.subr.mxu0 0.0
    %1003 = vmatpush1.msra.mxu0 0.0
    %1004 = vmatprep.subr.mxu0 0.0
    %1005 = vmatpush1.msra.mxu0 0.0
    %1006 = vmatprep.subr.mxu0 0.0
    %1007 = vmatpush1.msra.mxu0 0.0
    %1008 = vmatprep.subr.mxu0 0.0
    %1009 = vmatpush1.msra.mxu0 0.0
    %1010 = vmatprep.subr.mxu0 0.0
    %1011 = vmatpush1.msra.mxu0 0.0
    %1012 = vmatprep.subr.mxu0 0.0
    %1013 = vmatpush1.msra.mxu0 0.0
    %1014 = vmatprep.subr.mxu0 0.0
    %1015 = vmatpush1.msra.mxu0 0.0
    %1016 = vmatprep.subr.mxu0 0.0
    %1017 = vmatpush1.msra.mxu0 0.0
    %1018 = vmatprep.subr.mxu0 0.0
    %1019 = vmatpush1.msra.mxu0 0.0
    %1020 = vmatprep.subr.mxu0 0.0
    %1021 = vmatpush1.msra.mxu0 0.0
    %1022 = vmatprep.subr.mxu0 0.0
    %1023 = vmatpush1.msra.mxu0 0.0
    %1024 = vmatprep.subr.mxu0 0.0
    %1025 = vmatpush1.msra.mxu0 0.0
    %1026 = vmatprep.subr.mxu0 0.0
    %1027 = vmatpush1.msra.mxu0 0.0
    %1028 = vmatprep.subr.mxu0 0.0
    %1029 = vmatpush1.msra.mxu0 0.0
    %1030 = vmatprep.subr.mxu0 0.0
    %1031 = vmatpush1.msra.mxu0 0.0
    %1032 = vmatprep.subr.mxu0 0.0
    %1033 = vmatpush1.msra.mxu0 0.0
    %1034 = vmatprep.subr.mxu0 0.0
    %1035 = vmatpush1.msra.mxu0 0.0
    %1036 = vmatprep.mubr.f32.mxu0 0.0
    %1037 = vmatmul.mubr.f32.gmra.mrb[0].mxu0 %v162
    %v1038 = vpop.f32.mrb[0].mxu0
    %v1039 = vadd.f32 0.0, %v1038
    %v1040 = vpop.f32.mrb[0].mxu0
    %1041 = vmatprep.mubr.f32.mxu0 0.0
    %1042 = vmatmul.mubr.f32.gmra.mrb[0].mxu0 %v165
    %v1043 = vpop.f32.mrb[0].mxu0
    %v1044 = vadd.f32 0.0, %v1043
    %v1045 = vpop.f32.mrb[0].mxu0
    %1046 = vmatprep.mubr.f32.mxu0 0.0
    %1047 = vmatmul.mubr.f32.gmra.mrb[0].mxu0 %v168
    %v1048 = vpop.f32.mrb[0].mxu0
    %v1049 = vadd.f32 0.0, %v1048
    %v1050 = vpop.f32.mrb[0].mxu0
    %1051 = vmatprep.mubr.f32.mxu0 0.0
    %1052 = vmatmul.mubr.f32.gmra.mrb[0].mxu0 %v171
    %v1053 = vpop.f32.mrb[0].mxu0
    %v1054 = vadd.f32 0.0, %v1053
    %v1055 = vpop.f32.mrb[0].mxu0
    %1056 = vmatprep.mubr.f32.mxu0 0.0
    %1057 = vmatmul.mubr.f32.gmra.mrb[0].mxu0 %v174
    %v1058 = vpop.f32.mrb[0].mxu0
    %v1059 = vadd.f32 0.0, %v1058
    %v1060 = vpop.f32.mrb[0].mxu0
    %1061 = vmatprep.mubr.f32.mxu0 0.0
    %1062 = vmatmul.mubr.f32.gmra.mrb[0].mxu0 %v177
    %v1063 = vpop.f32.mrb[0].mxu0
    %v1064 = vadd.f32 0.0, %v1063
    %v1065 = vpop.f32.mrb[0].mxu0
    %1066 = vmatprep.mubr.f32.mxu0 0.0
    %1067 = vmatmul.mubr.f32.gmra.mrb[0].mxu0 %v180
    %v1068 = vpop.f32.mrb[0].mxu0
    %v1069 = vadd.f32 0.0, %v1068
    %v1070 = vpop.f32.mrb[0].mxu0
    %1071 = vmatprep.mubr.f32.mxu0 0.0
    %1072 = vmatmul.mubr.f32.gmra.mrb[0].mxu0 %v183
    %v1073 = vpop.f32.mrb[0].mxu0
    %v1074 = vadd.f32 0.0, %v1073
    %v1075 = vpop.f32.mrb[0].mxu0
    %1076 = vdwg.mxu0
    %v1077 = vld [vmem:[#allocation2] sm:$0xff]
    %v1078 = vld [vmem:[#allocation2 + $0x10] sm:$0xff]
    %v1079 = vld [vmem:[#allocation2 + $0x20] sm:$0xff]
    %v1080 = vld [vmem:[#allocation2 + $0x30] sm:$0xff]
    %v1081 = vld [vmem:[#allocation2 + $0x40] sm:$0xff]
    %v1082 = vld [vmem:[#allocation2 + $0x50] sm:$0xff]
    %v1083 = vld [vmem:[#allocation2 + $0x60] sm:$0xff]
    %v1084 = vld [vmem:[#allocation2 + $0x70] sm:$0xff]
    %v1085 = vadd.f32 %v1077, %v1039
    %v1086 = vadd.f32 %v1078, %v1044
    %v1087 = vadd.f32 %v1079, %v1049
    %v1088 = vadd.f32 %v1080, %v1054
    %v1089 = vadd.f32 %v1081, %v1059
    %v1090 = vadd.f32 %v1082, %v1064
    %v1091 = vadd.f32 %v1083, %v1069
    %v1092 = vadd.f32 %v1084, %v1074
    %1093 = vst.msk [vmem:[#allocation2] sm:$0xff] %vm28, %v1085
    %1094 = vst.msk [vmem:[#allocation2 + $0x10] sm:$0xff] %vm28, %v1086
    %1095 = vst.msk [vmem:[#allocation2 + $0x20] sm:$0xff] %vm28, %v1087
    %1096 = vst.msk [vmem:[#allocation2 + $0x30] sm:$0xff] %vm28, %v1088
    %1097 = vst.msk [vmem:[#allocation2 + $0x40] sm:$0xff] %vm28, %v1089
    %1098 = vst.msk [vmem:[#allocation2 + $0x50] sm:$0xff] %vm28, %v1090
    %1099 = vst.msk [vmem:[#allocation2 + $0x60] sm:$0xff] %vm28, %v1091
    %1100 = vst.msk [vmem:[#allocation2 + $0x70] sm:$0xff] %vm28, %v1092
    %v1101 = vld [vmem:[#allocation2] sm:$0xff]
    %v1102 = vld [vmem:[#allocation2 + $0x10] sm:$0xff]
    %v1103 = vld [vmem:[#allocation2 + $0x20] sm:$0xff]
    %v1104 = vld [vmem:[#allocation2 + $0x30] sm:$0xff]
    %v1105 = vld [vmem:[#allocation2 + $0x40] sm:$0xff]
    %v1106 = vld [vmem:[#allocation2 + $0x50] sm:$0xff]
    %v1107 = vld [vmem:[#allocation2 + $0x60] sm:$0xff]
    %v1108 = vld [vmem:[#allocation2 + $0x70] sm:$0xff]
    %v1109 = vmul.f32 %v1039, -4.0
    %v1110 = vmul.f32 %v1044, -4.0
    %v1111 = vmul.f32 %v1049, -4.0
    %v1112 = vmul.f32 %v1054, -4.0
    %v1113 = vmul.f32 %v1059, -4.0
    %v1114 = vmul.f32 %v1064, -4.0
    %v1115 = vmul.f32 %v1069, -4.0
    %v1116 = vmul.f32 %v1074, -4.0
    %1125 = vrot.lane.b32.xlu0 %v1109, 32
    %v1126 = vpop.permute.xlu0 %1125
    %1127 = vrot.lane.b32.xlu0 %v1110, 32
    %v1128 = vpop.permute.xlu0 %1127
    %1129 = vrot.lane.b32.xlu0 %v1111, 32
    %v1130 = vpop.permute.xlu0 %1129
    %1131 = vrot.lane.b32.xlu0 %v1112, 32
    %v1132 = vpop.permute.xlu0 %1131
    %1133 = vrot.lane.b32.xlu0 %v1113, 32
    %v1134 = vpop.permute.xlu0 %1133
    %1135 = vrot.lane.b32.xlu0 %v1114, 32
    %v1136 = vpop.permute.xlu0 %1135
    %1137 = vrot.lane.b32.xlu0 %v1115, 32
    %v1138 = vpop.permute.xlu0 %1137
    %1139 = vrot.lane.b32.xlu0 %v1116, 32
    %v1140 = vpop.permute.xlu0 %1139
    %v1149 = vadd.f32 %v1101, %v1126
    %v1150 = vadd.f32 %v1102, %v1128
    %v1151 = vadd.f32 %v1103, %v1130
    %v1152 = vadd.f32 %v1104, %v1132
    %v1153 = vadd.f32 %v1105, %v1134
    %v1154 = vadd.f32 %v1106, %v1136
    %v1155 = vadd.f32 %v1107, %v1138
    %v1156 = vadd.f32 %v1108, %v1140
    %1157 = vst.msk [vmem:[#allocation2] sm:$0xff] %vm77, %v1149
    %1158 = vst.msk [vmem:[#allocation2 + $0x10] sm:$0xff] %vm77, %v1150
    %1159 = vst.msk [vmem:[#allocation2 + $0x20] sm:$0xff] %vm77, %v1151
    %1160 = vst.msk [vmem:[#allocation2 + $0x30] sm:$0xff] %vm77, %v1152
    %1161 = vst.msk [vmem:[#allocation2 + $0x40] sm:$0xff] %vm77, %v1153
    %1162 = vst.msk [vmem:[#allocation2 + $0x50] sm:$0xff] %vm77, %v1154
    %1163 = vst.msk [vmem:[#allocation2 + $0x60] sm:$0xff] %vm77, %v1155
    %1164 = vst.msk [vmem:[#allocation2 + $0x70] sm:$0xff] %vm77, %v1156
    %v1165 = vld [vmem:[#allocation2] sm:$0xff]
    %v1166 = vld [vmem:[#allocation2 + $0x10] sm:$0xff]
    %v1167 = vld [vmem:[#allocation2 + $0x20] sm:$0xff]
    %v1168 = vld [vmem:[#allocation2 + $0x30] sm:$0xff]
    %v1169 = vld [vmem:[#allocation2 + $0x40] sm:$0xff]
    %v1170 = vld [vmem:[#allocation2 + $0x50] sm:$0xff]
    %v1171 = vld [vmem:[#allocation2 + $0x60] sm:$0xff]
    %v1172 = vld [vmem:[#allocation2 + $0x70] sm:$0xff]
    %v1173 = vmul.f32 %v1039, 6.0
    %v1174 = vmul.f32 %v1044, 6.0
    %v1175 = vmul.f32 %v1049, 6.0
    %v1176 = vmul.f32 %v1054, 6.0
    %v1177 = vmul.f32 %v1059, 6.0
    %v1178 = vmul.f32 %v1064, 6.0
    %v1179 = vmul.f32 %v1069, 6.0
    %v1180 = vmul.f32 %v1074, 6.0
    %1189 = vrot.lane.b32.xlu0 %v1173, 64
    %v1190 = vpop.permute.xlu0 %1189
    %1191 = vrot.lane.b32.xlu0 %v1174, 64
    %v1192 = vpop.permute.xlu0 %1191
    %1193 = vrot.lane.b32.xlu0 %v1175, 64
    %v1194 = vpop.permute.xlu0 %1193
    %1195 = vrot.lane.b32.xlu0 %v1176, 64
    %v1196 = vpop.permute.xlu0 %1195
    %1197 = vrot.lane.b32.xlu0 %v1177, 64
    %v1198 = vpop.permute.xlu0 %1197
    %1199 = vrot.lane.b32.xlu0 %v1178, 64
    %v1200 = vpop.permute.xlu0 %1199
    %1201 = vrot.lane.b32.xlu0 %v1179, 64
    %v1202 = vpop.permute.xlu0 %1201
    %1203 = vrot.lane.b32.xlu0 %v1180, 64
    %v1204 = vpop.permute.xlu0 %1203
    %v1213 = vadd.f32 %v1165, %v1190
    %v1214 = vadd.f32 %v1166, %v1192
    %v1215 = vadd.f32 %v1167, %v1194
    %v1216 = vadd.f32 %v1168, %v1196
    %v1217 = vadd.f32 %v1169, %v1198
    %v1218 = vadd.f32 %v1170, %v1200
    %v1219 = vadd.f32 %v1171, %v1202
    %v1220 = vadd.f32 %v1172, %v1204
    %1221 = vst.msk [vmem:[#allocation2] sm:$0xff] %vm110, %v1213
    %1222 = vst.msk [vmem:[#allocation2 + $0x10] sm:$0xff] %vm110, %v1214
    %1223 = vst.msk [vmem:[#allocation2 + $0x20] sm:$0xff] %vm110, %v1215
    %1224 = vst.msk [vmem:[#allocation2 + $0x30] sm:$0xff] %vm110, %v1216
    %1225 = vst.msk [vmem:[#allocation2 + $0x40] sm:$0xff] %vm110, %v1217
    %1226 = vst.msk [vmem:[#allocation2 + $0x50] sm:$0xff] %vm110, %v1218
    %1227 = vst.msk [vmem:[#allocation2 + $0x60] sm:$0xff] %vm110, %v1219
    %1228 = vst.msk [vmem:[#allocation2 + $0x70] sm:$0xff] %vm110, %v1220
    %v1229 = vld [vmem:[#allocation2] sm:$0xff]
    %v1230 = vld [vmem:[#allocation2 + $0x10] sm:$0xff]
    %v1231 = vld [vmem:[#allocation2 + $0x20] sm:$0xff]
    %v1232 = vld [vmem:[#allocation2 + $0x30] sm:$0xff]
    %v1233 = vld [vmem:[#allocation2 + $0x40] sm:$0xff]
    %v1234 = vld [vmem:[#allocation2 + $0x50] sm:$0xff]
    %v1235 = vld [vmem:[#allocation2 + $0x60] sm:$0xff]
    %v1236 = vld [vmem:[#allocation2 + $0x70] sm:$0xff]
    %1237 = vrot.lane.b32.xlu0 %v1109, 96
    %v1238 = vpop.permute.xlu0 %1237
    %1239 = vrot.lane.b32.xlu0 %v1110, 96
    %v1240 = vpop.permute.xlu0 %1239
    %1241 = vrot.lane.b32.xlu0 %v1111, 96
    %v1242 = vpop.permute.xlu0 %1241
    %1243 = vrot.lane.b32.xlu0 %v1112, 96
    %v1244 = vpop.permute.xlu0 %1243
    %1245 = vrot.lane.b32.xlu0 %v1113, 96
    %v1246 = vpop.permute.xlu0 %1245
    %1247 = vrot.lane.b32.xlu0 %v1114, 96
    %v1248 = vpop.permute.xlu0 %1247
    %1249 = vrot.lane.b32.xlu0 %v1115, 96
    %v1250 = vpop.permute.xlu0 %1249
    %1251 = vrot.lane.b32.xlu0 %v1116, 96
    %v1252 = vpop.permute.xlu0 %1251
    %v1261 = vadd.f32 %v1229, %v1238
    %v1262 = vadd.f32 %v1230, %v1240
    %v1263 = vadd.f32 %v1231, %v1242
    %v1264 = vadd.f32 %v1232, %v1244
    %v1265 = vadd.f32 %v1233, %v1246
    %v1266 = vadd.f32 %v1234, %v1248
    %v1267 = vadd.f32 %v1235, %v1250
    %v1268 = vadd.f32 %v1236, %v1252
    %1269 = vst.msk [vmem:[#allocation2] sm:$0xff] %vm143, %v1261
    %1270 = vst.msk [vmem:[#allocation2 + $0x10] sm:$0xff] %vm143, %v1262
    %1271 = vst.msk [vmem:[#allocation2 + $0x20] sm:$0xff] %vm143, %v1263
    %1272 = vst.msk [vmem:[#allocation2 + $0x30] sm:$0xff] %vm143, %v1264
    %1273 = vst.msk [vmem:[#allocation2 + $0x40] sm:$0xff] %vm143, %v1265
    %1274 = vst.msk [vmem:[#allocation2 + $0x50] sm:$0xff] %vm143, %v1266
    %1275 = vst.msk [vmem:[#allocation2 + $0x60] sm:$0xff] %vm143, %v1267
    %1276 = vst.msk [vmem:[#allocation2 + $0x70] sm:$0xff] %vm143, %v1268
    %v1277 = vld [vmem:[#allocation2 + $0x8] sm:$0xff]
    %v1278 = vld [vmem:[#allocation2 + $0x18] sm:$0xff]
    %v1279 = vld [vmem:[#allocation2 + $0x28] sm:$0xff]
    %v1280 = vld [vmem:[#allocation2 + $0x38] sm:$0xff]
    %v1281 = vld [vmem:[#allocation2 + $0x48] sm:$0xff]
    %v1282 = vld [vmem:[#allocation2 + $0x58] sm:$0xff]
    %v1283 = vld [vmem:[#allocation2 + $0x68] sm:$0xff]
    %v1284 = vld [vmem:[#allocation2 + $0x78] sm:$0xff]
    %v1285 = vadd.f32 %v1277, %v1039
    %v1286 = vadd.f32 %v1278, %v1044
    %v1287 = vadd.f32 %v1279, %v1049
    %v1288 = vadd.f32 %v1280, %v1054
    %v1289 = vadd.f32 %v1281, %v1059
    %v1290 = vadd.f32 %v1282, %v1064
    %v1291 = vadd.f32 %v1283, %v1069
    %v1292 = vadd.f32 %v1284, %v1074
    %1293 = vst.msk [vmem:[#allocation2 + $0x8] sm:$0xff] %vm28, %v1285
    %1294 = vst.msk [vmem:[#allocation2 + $0x18] sm:$0xff] %vm28, %v1286
    %1295 = vst.msk [vmem:[#allocation2 + $0x28] sm:$0xff] %vm28, %v1287
    %1296 = vst.msk [vmem:[#allocation2 + $0x38] sm:$0xff] %vm28, %v1288
    %1297 = vst.msk [vmem:[#allocation2 + $0x48] sm:$0xff] %vm28, %v1289
    %1298 = vst.msk [vmem:[#allocation2 + $0x58] sm:$0xff] %vm28, %v1290
    %1299 = vst.msk [vmem:[#allocation2 + $0x68] sm:$0xff] %vm28, %v1291
    %1300 = vst.msk [vmem:[#allocation2 + $0x78] sm:$0xff] %vm28, %v1292
    // Predicated region
    $region10: #{tpu_custom_call.1} parent=1 // pred_check
      _
    $region11: #{tpu_custom_call.1} parent=1 // pred_check_branch
      %1302 = sbr.rel (0) target = $region13
    $region12: #{tpu_custom_call.1} parent=1 // pred_region
      %s1304 = ssub.s32 2048, 2048
      %1305 = vsyncadd [#allocation3], %s1304
      %s1306 = sshll.u32 [#allocation2], 4
      %s1307 = int_to_ptr.vmem [resolvable:$true] %s1306
      %1312 = dma.vmem_to_hbm [thread:$0]  %s1307, 2048, %s2, [#allocation3], 256, 256, 16
    $region13: #{tpu_custom_call.1} parent=1 // pred_fallthru
      _
    // Predicated region
    $region14: #{tpu_custom_call.1} parent=1 // pred_check
      _
    $region15: #{tpu_custom_call.1} parent=1 // pred_check_branch
      %1314 = sbr.rel (0) target = $region17
    $region16: #{tpu_custom_call.1} parent=1 // pred_region
      %1315 = dma.done [#allocation3], 2048
    $region17: #{tpu_custom_call.1} parent=1 // pred_fallthru
      _
    %1316 = vsyncpa [#allocation3], 1

</llo_original>
